<compile_context>
chip_gen: v7x
topology: tpu7x:2x2x1
jax: 0.10.0
libtpu: 0.0.40
codegen_flags: <defaults>
</compile_context>

<pallas_src>
import jax
import jax.numpy as jnp
from jax import lax
from jax.experimental import pallas as pl
from jax.experimental.pallas import tpu as pltpu


def encoder_gru_kernel(ids_ref, table_ref, w_ref, b_ref, h0_ref, out_ref, emb_scr):
    S, H = out_ref.shape

    # --- Exact embedding gather: dynamic row loads (ids come from SMEM). ---
    for t in range(S):                                   # static trip count, unrolled
        emb_scr[t:t + 1, :] = table_ref[pl.ds(ids_ref[t], 1), :]
    emb_bf = emb_scr[...].astype(jnp.bfloat16)           # [S, H] bf16 MXU input

    wih = w_ref[:, :3 * H]                               # [H, 3H] bf16 (r, z, n)
    whh = w_ref[:, 3 * H:]                               # [H, 3H] bf16
    bih = b_ref[0:1, :]                                  # [1, 3H] f32
    bhh = b_ref[1:2, :]                                  # [1, 3H] f32

    # --- Hoisted input-path GEMM: one [S,H] x [H,3H] matmul, out of the loop. ---
    gi_all = jnp.dot(emb_bf, wih, preferred_element_type=jnp.float32) + bih   # [S,3H] f32

    h = h0_ref[...]                                      # [1, H] f32 carry
    for t in range(S):  # static trip count -> fully unrolled recurrence
        gh = jnp.dot(h.astype(jnp.bfloat16), whh,
                     preferred_element_type=jnp.float32) + bhh                # [1, 3H]
        gi = gi_all[t:t + 1, :]                                               # [1, 3H]
        # Fused r/z sigmoid: one EUP pass over [1, 2H], split at the vreg boundary.
        rz = jax.nn.sigmoid(gi[:, :2 * H] + gh[:, :2 * H])
        r = rz[:, :H]
        z = rz[:, H:]
        n = jnp.tanh(gi[:, 2 * H:] + r * gh[:, 2 * H:])
        h = n + z * (h - n)                              # == (1-z)*n + z*h
        out_ref[t:t + 1, :] = h                          # per-step store into VMEM tile


def pack_params(params):
    """One-time pre-packing: do transposes / casts / concat at init, not per call."""
    return {
        "embedding": params["embedding"].astype(jnp.float32),                       # [V, H]
        "w_packed": jnp.concatenate([params["w_ih"].T, params["w_hh"].T],
                                    axis=1).astype(jnp.bfloat16),                   # [H, 6H]
        "b_packed": jnp.stack([params["b_ih"], params["b_hh"]],
                              axis=0).astype(jnp.float32),                          # [2, 3H]
    }


def encoder_rnn_forward(inp, hidden, packed):
    """inp: [S] int32 token ids, hidden: [1, B, H] float32 (B=1 on the encoder path).
    Returns (output [S, B, H], hidden [1, B, H]) matching torch EncoderRNN.forward."""
    table = packed["embedding"]
    w = packed["w_packed"]
    b = packed["b_packed"]
    V, H = table.shape
    S = int(inp.shape[0])
    B = hidden.shape[1]
    # generate() always calls the encoder with a single id sequence (batch 1).
    assert B == 1

    ids = inp.astype(jnp.int32).reshape(S)
    h0 = hidden[0].astype(jnp.float32)                   # [1, H]

    cost = pl.CostEstimate(
        flops=2 * S * H * 3 * H + 2 * S * B * H * 3 * H,
        transcendentals=S * 3 * H,
        bytes_accessed=int(table.size) * 4 + int(w.size) * 2 + int(b.size) * 4
                       + (S + 1) * H * 4,
    )

    smem = pl.BlockSpec(memory_space=pltpu.MemorySpace.SMEM)
    vmem = lambda: pl.BlockSpec(memory_space=pltpu.MemorySpace.VMEM)

    out_sh = pl.pallas_call(
        encoder_gru_kernel,
        out_shape=jax.ShapeDtypeStruct((S, H), jnp.float32),
        in_specs=[smem,     # token ids [S]            (SMEM)
                  vmem(),   # embedding table [V, H]   (f32)
                  vmem(),   # packed W_ih^T|W_hh^T [H, 6H] (bf16)
                  vmem(),   # packed b_ih;b_hh [2, 3H] (f32)
                  vmem()],  # h0 [1, H]                (f32)
        out_specs=vmem(),
        scratch_shapes=[pltpu.VMEM((S, H), jnp.float32)],   # gathered embeddings
        cost_estimate=cost,
    )(ids, table, w, b, h0)

    out = out_sh[:, None, :]                 # [S, B=1, H]  (GRU output = h_t per step)
    h_out = out_sh[S - 1:S, :][None]         # [1, B=1, H]  (final hidden = last h_t)
    return out, h_out


def reference_forward(inp, hidden, params):
    """Pure-JAX f32 reference (lax.scan GRU) matching torch.nn.GRU semantics."""
    emb = params["embedding"][inp].astype(jnp.float32)[:, None, :]   # [S, B, H]
    w_ih, w_hh, b_ih, b_hh = (params["w_ih"], params["w_hh"],
                              params["b_ih"], params["b_hh"])
    H = w_hh.shape[1]

    def step(h, x):
        gi = x @ w_ih.T + b_ih
        gh = h @ w_hh.T + b_hh
        r = jax.nn.sigmoid(gi[:, :H] + gh[:, :H])
        z = jax.nn.sigmoid(gi[:, H:2 * H] + gh[:, H:2 * H])
        n = jnp.tanh(gi[:, 2 * H:] + r * gh[:, 2 * H:])
        h_new = (1.0 - z) * n + z * h
        return h_new, h_new

    h_last, outs = lax.scan(step, hidden[0], emb)
    return outs, h_last[None]


def init_params(key, input_size, hidden_size):
    k0, k1, k2, k3, k4 = jax.random.split(key, 5)
    bound = 1.0 / jnp.sqrt(hidden_size)
    return {
        "embedding": jax.random.normal(k0, (input_size, hidden_size), jnp.float32),
        "w_ih": jax.random.uniform(k1, (3 * hidden_size, hidden_size), jnp.float32,
                                   -bound, bound),
        "w_hh": jax.random.uniform(k2, (3 * hidden_size, hidden_size), jnp.float32,
                                   -bound, bound),
        "b_ih": jax.random.uniform(k3, (3 * hidden_size,), jnp.float32, -bound, bound),
        "b_hh": jax.random.uniform(k4, (3 * hidden_size,), jnp.float32, -bound, bound),
    }


if __name__ == "__main__":
    INPUT_SIZE = 64    # vocab size
    HIDDEN = 128       # hidden_size (lane-aligned for TPU)
    SEQ = 8
    BATCH = 1          # encoder is called with batch 1 in generate()

    key = jax.random.PRNGKey(0)
    pkey, ikey = jax.random.split(key)
    params = init_params(pkey, INPUT_SIZE, HIDDEN)
    packed = pack_params(params)             # one-time pre-pack (not per call)

    ids = jax.random.randint(ikey, (SEQ,), 0, INPUT_SIZE, jnp.int32)
    hidden0 = jnp.zeros((1, BATCH, HIDDEN), jnp.float32)   # encoder.initHidden(1)

    fwd = jax.jit(encoder_rnn_forward)       # amortize dispatch across repeated calls
    out, h_out = fwd(ids, hidden0, packed)
    out = jax.block_until_ready(out)
    h_out = jax.block_until_ready(h_out)

    ref_out, ref_h = reference_forward(ids, hidden0, params)
    assert out.shape == (SEQ, BATCH, HIDDEN)
    assert h_out.shape == (1, BATCH, HIDDEN)
    # bf16 MXU inputs with f32 accumulation -> loosened tolerance vs the f32 reference.
    assert jnp.allclose(out, ref_out, atol=2e-2, rtol=2e-2)
    assert jnp.allclose(h_out, ref_h, atol=2e-2, rtol=2e-2)

    print("KERNEL_OK")
</pallas_src>

<mosaic_0001>
module attributes {stable_mosaic.version = 11 : i64} {
  func.func @encoder_gru_kernel(%arg0: memref<8xi32, #tpu.memory_space<smem>>, %arg1: memref<64x128xf32, #tpu.memory_space<vmem>>, %arg2: memref<128x768xbf16, #tpu.memory_space<vmem>>, %arg3: memref<2x384xf32, #tpu.memory_space<vmem>>, %arg4: memref<1x128xf32, #tpu.memory_space<vmem>>, %arg5: memref<8x128xf32, #tpu.memory_space<vmem>>, %arg6: memref<8x128xf32, #tpu.memory_space<vmem>>) attributes {dimension_semantics = [], scalar_prefetch = 0 : i64, scratch_operands = 1 : i64, tpu.core_type = #tpu.core_type<tc>} {
    %c0 = arith.constant 0 : index
    %0 = memref.load %arg0[%c0] : memref<8xi32, #tpu.memory_space<smem>>
    %1 = arith.index_cast %0 : i32 to index
    %c0_0 = arith.constant 0 : index
    %2 = vector.load %arg1[%1, %c0_0] : memref<64x128xf32, #tpu.memory_space<vmem>>, vector<1x128xf32>
    %c0_1 = arith.constant 0 : index
    %c0_2 = arith.constant 0 : index
    %3 = vector.load %arg6[%c0_1, %c0_2] : memref<8x128xf32, #tpu.memory_space<vmem>>, vector<1x128xf32>
    tpu.vector_store %arg6[%c0_1, %c0_2], %2 {strides = array<i32>} : memref<8x128xf32, #tpu.memory_space<vmem>>, vector<1x128xf32>,
    %c1 = arith.constant 1 : index
    %4 = memref.load %arg0[%c1] : memref<8xi32, #tpu.memory_space<smem>>
    %5 = arith.index_cast %4 : i32 to index
    %c0_3 = arith.constant 0 : index
    %6 = vector.load %arg1[%5, %c0_3] : memref<64x128xf32, #tpu.memory_space<vmem>>, vector<1x128xf32>
    %c1_4 = arith.constant 1 : index
    %c0_5 = arith.constant 0 : index
    %7 = vector.load %arg6[%c1_4, %c0_5] : memref<8x128xf32, #tpu.memory_space<vmem>>, vector<1x128xf32>
    tpu.vector_store %arg6[%c1_4, %c0_5], %6 {strides = array<i32>} : memref<8x128xf32, #tpu.memory_space<vmem>>, vector<1x128xf32>,
    %c2 = arith.constant 2 : index
    %8 = memref.load %arg0[%c2] : memref<8xi32, #tpu.memory_space<smem>>
    %9 = arith.index_cast %8 : i32 to index
    %c0_6 = arith.constant 0 : index
    %10 = vector.load %arg1[%9, %c0_6] : memref<64x128xf32, #tpu.memory_space<vmem>>, vector<1x128xf32>
    %c2_7 = arith.constant 2 : index
    %c0_8 = arith.constant 0 : index
    %11 = vector.load %arg6[%c2_7, %c0_8] : memref<8x128xf32, #tpu.memory_space<vmem>>, vector<1x128xf32>
    tpu.vector_store %arg6[%c2_7, %c0_8], %10 {strides = array<i32>} : memref<8x128xf32, #tpu.memory_space<vmem>>, vector<1x128xf32>,
    %c3 = arith.constant 3 : index
    %12 = memref.load %arg0[%c3] : memref<8xi32, #tpu.memory_space<smem>>
    %13 = arith.index_cast %12 : i32 to index
    %c0_9 = arith.constant 0 : index
    %14 = vector.load %arg1[%13, %c0_9] : memref<64x128xf32, #tpu.memory_space<vmem>>, vector<1x128xf32>
    %c3_10 = arith.constant 3 : index
    %c0_11 = arith.constant 0 : index
    %15 = vector.load %arg6[%c3_10, %c0_11] : memref<8x128xf32, #tpu.memory_space<vmem>>, vector<1x128xf32>
    tpu.vector_store %arg6[%c3_10, %c0_11], %14 {strides = array<i32>} : memref<8x128xf32, #tpu.memory_space<vmem>>, vector<1x128xf32>,
    %c4 = arith.constant 4 : index
    %16 = memref.load %arg0[%c4] : memref<8xi32, #tpu.memory_space<smem>>
    %17 = arith.index_cast %16 : i32 to index
    %c0_12 = arith.constant 0 : index
    %18 = vector.load %arg1[%17, %c0_12] : memref<64x128xf32, #tpu.memory_space<vmem>>, vector<1x128xf32>
    %c4_13 = arith.constant 4 : index
    %c0_14 = arith.constant 0 : index
    %19 = vector.load %arg6[%c4_13, %c0_14] : memref<8x128xf32, #tpu.memory_space<vmem>>, vector<1x128xf32>
    tpu.vector_store %arg6[%c4_13, %c0_14], %18 {strides = array<i32>} : memref<8x128xf32, #tpu.memory_space<vmem>>, vector<1x128xf32>,
    %c5 = arith.constant 5 : index
    %20 = memref.load %arg0[%c5] : memref<8xi32, #tpu.memory_space<smem>>
    %21 = arith.index_cast %20 : i32 to index
    %c0_15 = arith.constant 0 : index
    %22 = vector.load %arg1[%21, %c0_15] : memref<64x128xf32, #tpu.memory_space<vmem>>, vector<1x128xf32>
    %c5_16 = arith.constant 5 : index
    %c0_17 = arith.constant 0 : index
    %23 = vector.load %arg6[%c5_16, %c0_17] : memref<8x128xf32, #tpu.memory_space<vmem>>, vector<1x128xf32>
    tpu.vector_store %arg6[%c5_16, %c0_17], %22 {strides = array<i32>} : memref<8x128xf32, #tpu.memory_space<vmem>>, vector<1x128xf32>,
    %c6 = arith.constant 6 : index
    %24 = memref.load %arg0[%c6] : memref<8xi32, #tpu.memory_space<smem>>
    %25 = arith.index_cast %24 : i32 to index
    %c0_18 = arith.constant 0 : index
    %26 = vector.load %arg1[%25, %c0_18] : memref<64x128xf32, #tpu.memory_space<vmem>>, vector<1x128xf32>
    %c6_19 = arith.constant 6 : index
    %c0_20 = arith.constant 0 : index
    %27 = vector.load %arg6[%c6_19, %c0_20] : memref<8x128xf32, #tpu.memory_space<vmem>>, vector<1x128xf32>
    tpu.vector_store %arg6[%c6_19, %c0_20], %26 {strides = array<i32>} : memref<8x128xf32, #tpu.memory_space<vmem>>, vector<1x128xf32>,
    %c7 = arith.constant 7 : index
    %28 = memref.load %arg0[%c7] : memref<8xi32, #tpu.memory_space<smem>>
    %29 = arith.index_cast %28 : i32 to index
    %c0_21 = arith.constant 0 : index
    %30 = vector.load %arg1[%29, %c0_21] : memref<64x128xf32, #tpu.memory_space<vmem>>, vector<1x128xf32>
    %c7_22 = arith.constant 7 : index
    %c0_23 = arith.constant 0 : index
    %31 = vector.load %arg6[%c7_22, %c0_23] : memref<8x128xf32, #tpu.memory_space<vmem>>, vector<1x128xf32>
    tpu.vector_store %arg6[%c7_22, %c0_23], %30 {strides = array<i32>} : memref<8x128xf32, #tpu.memory_space<vmem>>, vector<1x128xf32>,
    %c0_24 = arith.constant 0 : index
    %c0_25 = arith.constant 0 : index
    %32 = vector.load %arg6[%c0_24, %c0_25] : memref<8x128xf32, #tpu.memory_space<vmem>>, vector<8x128xf32>
    %33 = arith.truncf %32 : vector<8x128xf32> to vector<8x128xbf16>
    %c0_26 = arith.constant 0 : index
    %c0_27 = arith.constant 0 : index
    %34 = vector.load %arg2[%c0_26, %c0_27] : memref<128x768xbf16, #tpu.memory_space<vmem>>, vector<128x384xbf16>
    %c0_28 = arith.constant 0 : index
    %c384 = arith.constant 384 : index
    %35 = vector.load %arg2[%c0_28, %c384] : memref<128x768xbf16, #tpu.memory_space<vmem>>, vector<128x384xbf16>
    %c0_29 = arith.constant 0 : index
    %c0_30 = arith.constant 0 : index
    %36 = vector.load %arg3[%c0_29, %c0_30] : memref<2x384xf32, #tpu.memory_space<vmem>>, vector<1x384xf32>
    %c1_31 = arith.constant 1 : index
    %c0_32 = arith.constant 0 : index
    %37 = vector.load %arg3[%c1_31, %c0_32] : memref<2x384xf32, #tpu.memory_space<vmem>>, vector<1x384xf32>
    %cst = arith.constant dense<0.000000e+00> : vector<8x384xf32>
    %38 = tpu.matmul %33, %34, %cst {dimension_numbers = #tpu.dot_dimension_numbers<[1], [0], [0], [1], [0, 0, 1, 1], [], []>} : vector<8x128xbf16>, vector<128x384xbf16>, vector<8x384xf32> -> vector<8x384xf32>
    %39 = vector.broadcast %36 : vector<1x384xf32> to vector<8x384xf32>
    %40 = arith.addf %38, %39 : vector<8x384xf32>
    %c0_33 = arith.constant 0 : index
    %c0_34 = arith.constant 0 : index
    %41 = vector.load %arg4[%c0_33, %c0_34] : memref<1x128xf32, #tpu.memory_space<vmem>>, vector<1x128xf32>
    %42 = arith.truncf %41 : vector<1x128xf32> to vector<1x128xbf16>
    %cst_35 = arith.constant dense<0.000000e+00> : vector<1x384xf32>
    %43 = tpu.matmul %42, %35, %cst_35 {dimension_numbers = #tpu.dot_dimension_numbers<[1], [0], [0], [1], [0, 0, 1, 1], [], []>} : vector<1x128xbf16>, vector<128x384xbf16>, vector<1x384xf32> -> vector<1x384xf32>
    %44 = arith.addf %43, %37 : vector<1x384xf32>
    %45 = vector.extract_strided_slice %40 {offsets = [0, 0], sizes = [1, 384], strides = [1, 1]} : vector<8x384xf32> to vector<1x384xf32>
    %46 = vector.extract_strided_slice %45 {offsets = [0, 0], sizes = [1, 256], strides = [1, 1]} : vector<1x384xf32> to vector<1x256xf32>
    %47 = vector.extract_strided_slice %44 {offsets = [0, 0], sizes = [1, 256], strides = [1, 1]} : vector<1x384xf32> to vector<1x256xf32>
    %48 = arith.addf %46, %47 : vector<1x256xf32>
    %49 = arith.negf %48 : vector<1x256xf32>
    %50 = math.exp %49 : vector<1x256xf32>
    %cst_36 = arith.constant 1.000000e+00 : f32
    %51 = vector.broadcast %cst_36 : f32 to vector<1x256xf32>
    %52 = arith.addf %51, %50 : vector<1x256xf32>
    %53 = arith.divf %51, %52 : vector<1x256xf32>
    %54 = vector.extract_strided_slice %53 {offsets = [0, 0], sizes = [1, 128], strides = [1, 1]} : vector<1x256xf32> to vector<1x128xf32>
    %55 = vector.extract_strided_slice %53 {offsets = [0, 128], sizes = [1, 128], strides = [1, 1]} : vector<1x256xf32> to vector<1x128xf32>
    %56 = vector.extract_strided_slice %45 {offsets = [0, 256], sizes = [1, 128], strides = [1, 1]} : vector<1x384xf32> to vector<1x128xf32>
    %57 = vector.extract_strided_slice %44 {offsets = [0, 256], sizes = [1, 128], strides = [1, 1]} : vector<1x384xf32> to vector<1x128xf32>
    %58 = arith.mulf %54, %57 : vector<1x128xf32>
    %59 = arith.addf %56, %58 : vector<1x128xf32>
    %60 = math.tanh %59 : vector<1x128xf32>
    %61 = arith.subf %41, %60 : vector<1x128xf32>
    %62 = arith.mulf %55, %61 : vector<1x128xf32>
    %63 = arith.addf %60, %62 : vector<1x128xf32>
    %c0_37 = arith.constant 0 : index
    %c0_38 = arith.constant 0 : index
    %64 = vector.load %arg5[%c0_37, %c0_38] : memref<8x128xf32, #tpu.memory_space<vmem>>, vector<1x128xf32>
    tpu.vector_store %arg5[%c0_37, %c0_38], %63 {strides = array<i32>} : memref<8x128xf32, #tpu.memory_space<vmem>>, vector<1x128xf32>,
    %65 = arith.truncf %63 : vector<1x128xf32> to vector<1x128xbf16>
    %cst_39 = arith.constant dense<0.000000e+00> : vector<1x384xf32>
    %66 = tpu.matmul %65, %35, %cst_39 {dimension_numbers = #tpu.dot_dimension_numbers<[1], [0], [0], [1], [0, 0, 1, 1], [], []>} : vector<1x128xbf16>, vector<128x384xbf16>, vector<1x384xf32> -> vector<1x384xf32>
    %67 = arith.addf %66, %37 : vector<1x384xf32>
    %68 = vector.extract_strided_slice %40 {offsets = [1, 0], sizes = [1, 384], strides = [1, 1]} : vector<8x384xf32> to vector<1x384xf32>
    %69 = vector.extract_strided_slice %68 {offsets = [0, 0], sizes = [1, 256], strides = [1, 1]} : vector<1x384xf32> to vector<1x256xf32>
    %70 = vector.extract_strided_slice %67 {offsets = [0, 0], sizes = [1, 256], strides = [1, 1]} : vector<1x384xf32> to vector<1x256xf32>
    %71 = arith.addf %69, %70 : vector<1x256xf32>
    %72 = arith.negf %71 : vector<1x256xf32>
    %73 = math.exp %72 : vector<1x256xf32>
    %cst_40 = arith.constant 1.000000e+00 : f32
    %74 = vector.broadcast %cst_40 : f32 to vector<1x256xf32>
    %75 = arith.addf %74, %73 : vector<1x256xf32>
    %76 = arith.divf %74, %75 : vector<1x256xf32>
    %77 = vector.extract_strided_slice %76 {offsets = [0, 0], sizes = [1, 128], strides = [1, 1]} : vector<1x256xf32> to vector<1x128xf32>
    %78 = vector.extract_strided_slice %76 {offsets = [0, 128], sizes = [1, 128], strides = [1, 1]} : vector<1x256xf32> to vector<1x128xf32>
    %79 = vector.extract_strided_slice %68 {offsets = [0, 256], sizes = [1, 128], strides = [1, 1]} : vector<1x384xf32> to vector<1x128xf32>
    %80 = vector.extract_strided_slice %67 {offsets = [0, 256], sizes = [1, 128], strides = [1, 1]} : vector<1x384xf32> to vector<1x128xf32>
    %81 = arith.mulf %77, %80 : vector<1x128xf32>
    %82 = arith.addf %79, %81 : vector<1x128xf32>
    %83 = math.tanh %82 : vector<1x128xf32>
    %84 = arith.subf %63, %83 : vector<1x128xf32>
    %85 = arith.mulf %78, %84 : vector<1x128xf32>
    %86 = arith.addf %83, %85 : vector<1x128xf32>
    %c1_41 = arith.constant 1 : index
    %c0_42 = arith.constant 0 : index
    %87 = vector.load %arg5[%c1_41, %c0_42] : memref<8x128xf32, #tpu.memory_space<vmem>>, vector<1x128xf32>
    tpu.vector_store %arg5[%c1_41, %c0_42], %86 {strides = array<i32>} : memref<8x128xf32, #tpu.memory_space<vmem>>, vector<1x128xf32>,
    %88 = arith.truncf %86 : vector<1x128xf32> to vector<1x128xbf16>
    %cst_43 = arith.constant dense<0.000000e+00> : vector<1x384xf32>
    %89 = tpu.matmul %88, %35, %cst_43 {dimension_numbers = #tpu.dot_dimension_numbers<[1], [0], [0], [1], [0, 0, 1, 1], [], []>} : vector<1x128xbf16>, vector<128x384xbf16>, vector<1x384xf32> -> vector<1x384xf32>
    %90 = arith.addf %89, %37 : vector<1x384xf32>
    %91 = vector.extract_strided_slice %40 {offsets = [2, 0], sizes = [1, 384], strides = [1, 1]} : vector<8x384xf32> to vector<1x384xf32>
    %92 = vector.extract_strided_slice %91 {offsets = [0, 0], sizes = [1, 256], strides = [1, 1]} : vector<1x384xf32> to vector<1x256xf32>
    %93 = vector.extract_strided_slice %90 {offsets = [0, 0], sizes = [1, 256], strides = [1, 1]} : vector<1x384xf32> to vector<1x256xf32>
    %94 = arith.addf %92, %93 : vector<1x256xf32>
    %95 = arith.negf %94 : vector<1x256xf32>
    %96 = math.exp %95 : vector<1x256xf32>
    %cst_44 = arith.constant 1.000000e+00 : f32
    %97 = vector.broadcast %cst_44 : f32 to vector<1x256xf32>
    %98 = arith.addf %97, %96 : vector<1x256xf32>
    %99 = arith.divf %97, %98 : vector<1x256xf32>
    %100 = vector.extract_strided_slice %99 {offsets = [0, 0], sizes = [1, 128], strides = [1, 1]} : vector<1x256xf32> to vector<1x128xf32>
    %101 = vector.extract_strided_slice %99 {offsets = [0, 128], sizes = [1, 128], strides = [1, 1]} : vector<1x256xf32> to vector<1x128xf32>
    %102 = vector.extract_strided_slice %91 {offsets = [0, 256], sizes = [1, 128], strides = [1, 1]} : vector<1x384xf32> to vector<1x128xf32>
    %103 = vector.extract_strided_slice %90 {offsets = [0, 256], sizes = [1, 128], strides = [1, 1]} : vector<1x384xf32> to vector<1x128xf32>
    %104 = arith.mulf %100, %103 : vector<1x128xf32>
    %105 = arith.addf %102, %104 : vector<1x128xf32>
    %106 = math.tanh %105 : vector<1x128xf32>
    %107 = arith.subf %86, %106 : vector<1x128xf32>
    %108 = arith.mulf %101, %107 : vector<1x128xf32>
    %109 = arith.addf %106, %108 : vector<1x128xf32>
    %c2_45 = arith.constant 2 : index
    %c0_46 = arith.constant 0 : index
    %110 = vector.load %arg5[%c2_45, %c0_46] : memref<8x128xf32, #tpu.memory_space<vmem>>, vector<1x128xf32>
    tpu.vector_store %arg5[%c2_45, %c0_46], %109 {strides = array<i32>} : memref<8x128xf32, #tpu.memory_space<vmem>>, vector<1x128xf32>,
    %111 = arith.truncf %109 : vector<1x128xf32> to vector<1x128xbf16>
    %cst_47 = arith.constant dense<0.000000e+00> : vector<1x384xf32>
    %112 = tpu.matmul %111, %35, %cst_47 {dimension_numbers = #tpu.dot_dimension_numbers<[1], [0], [0], [1], [0, 0, 1, 1], [], []>} : vector<1x128xbf16>, vector<128x384xbf16>, vector<1x384xf32> -> vector<1x384xf32>
    %113 = arith.addf %112, %37 : vector<1x384xf32>
    %114 = vector.extract_strided_slice %40 {offsets = [3, 0], sizes = [1, 384], strides = [1, 1]} : vector<8x384xf32> to vector<1x384xf32>
    %115 = vector.extract_strided_slice %114 {offsets = [0, 0], sizes = [1, 256], strides = [1, 1]} : vector<1x384xf32> to vector<1x256xf32>
    %116 = vector.extract_strided_slice %113 {offsets = [0, 0], sizes = [1, 256], strides = [1, 1]} : vector<1x384xf32> to vector<1x256xf32>
    %117 = arith.addf %115, %116 : vector<1x256xf32>
    %118 = arith.negf %117 : vector<1x256xf32>
    %119 = math.exp %118 : vector<1x256xf32>
    %cst_48 = arith.constant 1.000000e+00 : f32
    %120 = vector.broadcast %cst_48 : f32 to vector<1x256xf32>
    %121 = arith.addf %120, %119 : vector<1x256xf32>
    %122 = arith.divf %120, %121 : vector<1x256xf32>
    %123 = vector.extract_strided_slice %122 {offsets = [0, 0], sizes = [1, 128], strides = [1, 1]} : vector<1x256xf32> to vector<1x128xf32>
    %124 = vector.extract_strided_slice %122 {offsets = [0, 128], sizes = [1, 128], strides = [1, 1]} : vector<1x256xf32> to vector<1x128xf32>
    %125 = vector.extract_strided_slice %114 {offsets = [0, 256], sizes = [1, 128], strides = [1, 1]} : vector<1x384xf32> to vector<1x128xf32>
    %126 = vector.extract_strided_slice %113 {offsets = [0, 256], sizes = [1, 128], strides = [1, 1]} : vector<1x384xf32> to vector<1x128xf32>
    %127 = arith.mulf %123, %126 : vector<1x128xf32>
    %128 = arith.addf %125, %127 : vector<1x128xf32>
    %129 = math.tanh %128 : vector<1x128xf32>
    %130 = arith.subf %109, %129 : vector<1x128xf32>
    %131 = arith.mulf %124, %130 : vector<1x128xf32>
    %132 = arith.addf %129, %131 : vector<1x128xf32>
    %c3_49 = arith.constant 3 : index
    %c0_50 = arith.constant 0 : index
    %133 = vector.load %arg5[%c3_49, %c0_50] : memref<8x128xf32, #tpu.memory_space<vmem>>, vector<1x128xf32>
    tpu.vector_store %arg5[%c3_49, %c0_50], %132 {strides = array<i32>} : memref<8x128xf32, #tpu.memory_space<vmem>>, vector<1x128xf32>,
    %134 = arith.truncf %132 : vector<1x128xf32> to vector<1x128xbf16>
    %cst_51 = arith.constant dense<0.000000e+00> : vector<1x384xf32>
    %135 = tpu.matmul %134, %35, %cst_51 {dimension_numbers = #tpu.dot_dimension_numbers<[1], [0], [0], [1], [0, 0, 1, 1], [], []>} : vector<1x128xbf16>, vector<128x384xbf16>, vector<1x384xf32> -> vector<1x384xf32>
    %136 = arith.addf %135, %37 : vector<1x384xf32>
    %137 = vector.extract_strided_slice %40 {offsets = [4, 0], sizes = [1, 384], strides = [1, 1]} : vector<8x384xf32> to vector<1x384xf32>
    %138 = vector.extract_strided_slice %137 {offsets = [0, 0], sizes = [1, 256], strides = [1, 1]} : vector<1x384xf32> to vector<1x256xf32>
    %139 = vector.extract_strided_slice %136 {offsets = [0, 0], sizes = [1, 256], strides = [1, 1]} : vector<1x384xf32> to vector<1x256xf32>
    %140 = arith.addf %138, %139 : vector<1x256xf32>
    %141 = arith.negf %140 : vector<1x256xf32>
    %142 = math.exp %141 : vector<1x256xf32>
    %cst_52 = arith.constant 1.000000e+00 : f32
    %143 = vector.broadcast %cst_52 : f32 to vector<1x256xf32>
    %144 = arith.addf %143, %142 : vector<1x256xf32>
    %145 = arith.divf %143, %144 : vector<1x256xf32>
    %146 = vector.extract_strided_slice %145 {offsets = [0, 0], sizes = [1, 128], strides = [1, 1]} : vector<1x256xf32> to vector<1x128xf32>
    %147 = vector.extract_strided_slice %145 {offsets = [0, 128], sizes = [1, 128], strides = [1, 1]} : vector<1x256xf32> to vector<1x128xf32>
    %148 = vector.extract_strided_slice %137 {offsets = [0, 256], sizes = [1, 128], strides = [1, 1]} : vector<1x384xf32> to vector<1x128xf32>
    %149 = vector.extract_strided_slice %136 {offsets = [0, 256], sizes = [1, 128], strides = [1, 1]} : vector<1x384xf32> to vector<1x128xf32>
    %150 = arith.mulf %146, %149 : vector<1x128xf32>
    %151 = arith.addf %148, %150 : vector<1x128xf32>
    %152 = math.tanh %151 : vector<1x128xf32>
    %153 = arith.subf %132, %152 : vector<1x128xf32>
    %154 = arith.mulf %147, %153 : vector<1x128xf32>
    %155 = arith.addf %152, %154 : vector<1x128xf32>
    %c4_53 = arith.constant 4 : index
    %c0_54 = arith.constant 0 : index
    %156 = vector.load %arg5[%c4_53, %c0_54] : memref<8x128xf32, #tpu.memory_space<vmem>>, vector<1x128xf32>
    tpu.vector_store %arg5[%c4_53, %c0_54], %155 {strides = array<i32>} : memref<8x128xf32, #tpu.memory_space<vmem>>, vector<1x128xf32>,
    %157 = arith.truncf %155 : vector<1x128xf32> to vector<1x128xbf16>
    %cst_55 = arith.constant dense<0.000000e+00> : vector<1x384xf32>
    %158 = tpu.matmul %157, %35, %cst_55 {dimension_numbers = #tpu.dot_dimension_numbers<[1], [0], [0], [1], [0, 0, 1, 1], [], []>} : vector<1x128xbf16>, vector<128x384xbf16>, vector<1x384xf32> -> vector<1x384xf32>
    %159 = arith.addf %158, %37 : vector<1x384xf32>
    %160 = vector.extract_strided_slice %40 {offsets = [5, 0], sizes = [1, 384], strides = [1, 1]} : vector<8x384xf32> to vector<1x384xf32>
    %161 = vector.extract_strided_slice %160 {offsets = [0, 0], sizes = [1, 256], strides = [1, 1]} : vector<1x384xf32> to vector<1x256xf32>
    %162 = vector.extract_strided_slice %159 {offsets = [0, 0], sizes = [1, 256], strides = [1, 1]} : vector<1x384xf32> to vector<1x256xf32>
    %163 = arith.addf %161, %162 : vector<1x256xf32>
    %164 = arith.negf %163 : vector<1x256xf32>
    %165 = math.exp %164 : vector<1x256xf32>
    %cst_56 = arith.constant 1.000000e+00 : f32
    %166 = vector.broadcast %cst_56 : f32 to vector<1x256xf32>
    %167 = arith.addf %166, %165 : vector<1x256xf32>
    %168 = arith.divf %166, %167 : vector<1x256xf32>
    %169 = vector.extract_strided_slice %168 {offsets = [0, 0], sizes = [1, 128], strides = [1, 1]} : vector<1x256xf32> to vector<1x128xf32>
    %170 = vector.extract_strided_slice %168 {offsets = [0, 128], sizes = [1, 128], strides = [1, 1]} : vector<1x256xf32> to vector<1x128xf32>
    %171 = vector.extract_strided_slice %160 {offsets = [0, 256], sizes = [1, 128], strides = [1, 1]} : vector<1x384xf32> to vector<1x128xf32>
    %172 = vector.extract_strided_slice %159 {offsets = [0, 256], sizes = [1, 128], strides = [1, 1]} : vector<1x384xf32> to vector<1x128xf32>
    %173 = arith.mulf %169, %172 : vector<1x128xf32>
    %174 = arith.addf %171, %173 : vector<1x128xf32>
    %175 = math.tanh %174 : vector<1x128xf32>
    %176 = arith.subf %155, %175 : vector<1x128xf32>
    %177 = arith.mulf %170, %176 : vector<1x128xf32>
    %178 = arith.addf %175, %177 : vector<1x128xf32>
    %c5_57 = arith.constant 5 : index
    %c0_58 = arith.constant 0 : index
    %179 = vector.load %arg5[%c5_57, %c0_58] : memref<8x128xf32, #tpu.memory_space<vmem>>, vector<1x128xf32>
    tpu.vector_store %arg5[%c5_57, %c0_58], %178 {strides = array<i32>} : memref<8x128xf32, #tpu.memory_space<vmem>>, vector<1x128xf32>,
    %180 = arith.truncf %178 : vector<1x128xf32> to vector<1x128xbf16>
    %cst_59 = arith.constant dense<0.000000e+00> : vector<1x384xf32>
    %181 = tpu.matmul %180, %35, %cst_59 {dimension_numbers = #tpu.dot_dimension_numbers<[1], [0], [0], [1], [0, 0, 1, 1], [], []>} : vector<1x128xbf16>, vector<128x384xbf16>, vector<1x384xf32> -> vector<1x384xf32>
    %182 = arith.addf %181, %37 : vector<1x384xf32>
    %183 = vector.extract_strided_slice %40 {offsets = [6, 0], sizes = [1, 384], strides = [1, 1]} : vector<8x384xf32> to vector<1x384xf32>
    %184 = vector.extract_strided_slice %183 {offsets = [0, 0], sizes = [1, 256], strides = [1, 1]} : vector<1x384xf32> to vector<1x256xf32>
    %185 = vector.extract_strided_slice %182 {offsets = [0, 0], sizes = [1, 256], strides = [1, 1]} : vector<1x384xf32> to vector<1x256xf32>
    %186 = arith.addf %184, %185 : vector<1x256xf32>
    %187 = arith.negf %186 : vector<1x256xf32>
    %188 = math.exp %187 : vector<1x256xf32>
    %cst_60 = arith.constant 1.000000e+00 : f32
    %189 = vector.broadcast %cst_60 : f32 to vector<1x256xf32>
    %190 = arith.addf %189, %188 : vector<1x256xf32>
    %191 = arith.divf %189, %190 : vector<1x256xf32>
    %192 = vector.extract_strided_slice %191 {offsets = [0, 0], sizes = [1, 128], strides = [1, 1]} : vector<1x256xf32> to vector<1x128xf32>
    %193 = vector.extract_strided_slice %191 {offsets = [0, 128], sizes = [1, 128], strides = [1, 1]} : vector<1x256xf32> to vector<1x128xf32>
    %194 = vector.extract_strided_slice %183 {offsets = [0, 256], sizes = [1, 128], strides = [1, 1]} : vector<1x384xf32> to vector<1x128xf32>
    %195 = vector.extract_strided_slice %182 {offsets = [0, 256], sizes = [1, 128], strides = [1, 1]} : vector<1x384xf32> to vector<1x128xf32>
    %196 = arith.mulf %192, %195 : vector<1x128xf32>
    %197 = arith.addf %194, %196 : vector<1x128xf32>
    %198 = math.tanh %197 : vector<1x128xf32>
    %199 = arith.subf %178, %198 : vector<1x128xf32>
    %200 = arith.mulf %193, %199 : vector<1x128xf32>
    %201 = arith.addf %198, %200 : vector<1x128xf32>
    %c6_61 = arith.constant 6 : index
    %c0_62 = arith.constant 0 : index
    %202 = vector.load %arg5[%c6_61, %c0_62] : memref<8x128xf32, #tpu.memory_space<vmem>>, vector<1x128xf32>
    tpu.vector_store %arg5[%c6_61, %c0_62], %201 {strides = array<i32>} : memref<8x128xf32, #tpu.memory_space<vmem>>, vector<1x128xf32>,
    %203 = arith.truncf %201 : vector<1x128xf32> to vector<1x128xbf16>
    %cst_63 = arith.constant dense<0.000000e+00> : vector<1x384xf32>
    %204 = tpu.matmul %203, %35, %cst_63 {dimension_numbers = #tpu.dot_dimension_numbers<[1], [0], [0], [1], [0, 0, 1, 1], [], []>} : vector<1x128xbf16>, vector<128x384xbf16>, vector<1x384xf32> -> vector<1x384xf32>
    %205 = arith.addf %204, %37 : vector<1x384xf32>
    %206 = vector.extract_strided_slice %40 {offsets = [7, 0], sizes = [1, 384], strides = [1, 1]} : vector<8x384xf32> to vector<1x384xf32>
    %207 = vector.extract_strided_slice %206 {offsets = [0, 0], sizes = [1, 256], strides = [1, 1]} : vector<1x384xf32> to vector<1x256xf32>
    %208 = vector.extract_strided_slice %205 {offsets = [0, 0], sizes = [1, 256], strides = [1, 1]} : vector<1x384xf32> to vector<1x256xf32>
    %209 = arith.addf %207, %208 : vector<1x256xf32>
    %210 = arith.negf %209 : vector<1x256xf32>
    %211 = math.exp %210 : vector<1x256xf32>
    %cst_64 = arith.constant 1.000000e+00 : f32
    %212 = vector.broadcast %cst_64 : f32 to vector<1x256xf32>
    %213 = arith.addf %212, %211 : vector<1x256xf32>
    %214 = arith.divf %212, %213 : vector<1x256xf32>
    %215 = vector.extract_strided_slice %214 {offsets = [0, 0], sizes = [1, 128], strides = [1, 1]} : vector<1x256xf32> to vector<1x128xf32>
    %216 = vector.extract_strided_slice %214 {offsets = [0, 128], sizes = [1, 128], strides = [1, 1]} : vector<1x256xf32> to vector<1x128xf32>
    %217 = vector.extract_strided_slice %206 {offsets = [0, 256], sizes = [1, 128], strides = [1, 1]} : vector<1x384xf32> to vector<1x128xf32>
    %218 = vector.extract_strided_slice %205 {offsets = [0, 256], sizes = [1, 128], strides = [1, 1]} : vector<1x384xf32> to vector<1x128xf32>
    %219 = arith.mulf %215, %218 : vector<1x128xf32>
    %220 = arith.addf %217, %219 : vector<1x128xf32>
    %221 = math.tanh %220 : vector<1x128xf32>
    %222 = arith.subf %201, %221 : vector<1x128xf32>
    %223 = arith.mulf %216, %222 : vector<1x128xf32>
    %224 = arith.addf %221, %223 : vector<1x128xf32>
    %c7_65 = arith.constant 7 : index
    %c0_66 = arith.constant 0 : index
    %225 = vector.load %arg5[%c7_65, %c0_66] : memref<8x128xf32, #tpu.memory_space<vmem>>, vector<1x128xf32>
    tpu.vector_store %arg5[%c7_65, %c0_66], %224 {strides = array<i32>} : memref<8x128xf32, #tpu.memory_space<vmem>>, vector<1x128xf32>,
    return
  }
}

</mosaic_0001>

<llo_original>
// kernel: encoder_rnn_forward.1
$region0: #{encoder_rnn_forward.1}
  #allocation0 [shape = 'u32[]', space=smem, size = 0x4, offset = 0x4, fixed_abs, tag = 'smem constant byte address 0x4 - core index']
  #allocation1 [shape = 'u32[144,128]{1,0:T(1,128)}', space=vmem, size = 0x12000, scoped, tag = 'internal scratch']
  #allocation2 [shape = 'f32[8,128]{1,0:T(8,128)}', space=vmem, size = 0x1000, scoped, tag = 'scratch operand']
  %s0 = inlined_call_operand.vmem [shape: s32[8], index: 0, kind: input, shape index: {}]
  %s1 = inlined_call_operand.hbm [shape: f32[64,128], index: 1, kind: input, shape index: {}]
  %s2 = inlined_call_operand.hbm [shape: bf16[128,768], index: 2, kind: input, shape index: {}]
  %s3 = inlined_call_operand.vmem [shape: f32[2,384], index: 3, kind: input, shape index: {}]
  %s4 = inlined_call_operand.vmem [shape: f32[1,128], index: 4, kind: input, shape index: {}]
  %s5 = inlined_call_operand.vmem [shape: f32[8,128], index: 5, kind: output, shape index: {}]
  %s6 = sld [smem:[#allocation0]]
  $region42: #{encoder_rnn_forward.1} parent=0
    _
  %s8 = ssub.s32 1, %s6
  %s9 = scalar_select 0, %s8, %s6
  $region1: #{encoder_rnn_forward.1} parent=0
    #allocation3 [shape = 'u8[512]{0}', space=smem, size = 0x200, scoped, tag = 'input window, operand 0, single buffered']
    #allocation4 [shape = 's32[1]{0}', space=sflag, size = 0x4, scoped, tag = 'scoped memory for encoder_rnn_forward.1']
    #allocation5 [shape = 's32[1]{0}', space=sflag, size = 0x4, scoped, tag = 'scoped memory for encoder_rnn_forward.1']
    #allocation6 [shape = 'u8[32768]{0}', space=vmem, size = 0x8000, scoped, tag = 'input window, operand 1, single buffered']
    #allocation7 [shape = 'u8[196608]{0}', space=vmem, size = 0x30000, scoped, tag = 'input window, operand 2, single buffered']
    #allocation8 [shape = 's32[1]{0}', space=sflag, size = 0x4, scoped, tag = 'scoped memory for encoder_rnn_forward.1']
    %10 = vsyncpa [#allocation5], 0
    %11 = vsyncpa [#allocation4], 0
    %12 = vsyncpa [#allocation8], 0
    // Predicated region
    $region2: #{encoder_rnn_forward.1} parent=1 // pred_check
      _
    $region3: #{encoder_rnn_forward.1} parent=1 // pred_check_branch
      %14 = sbr.rel (0) target = $region5
    $region4: #{encoder_rnn_forward.1} parent=1 // pred_region
      %s16 = ssub.s32 16, 16
      %17 = vsyncadd [#allocation5], %s16
      %s19 = sshll.u32 %s0, 4
      %s20 = int_to_ptr.vmem [resolvable:$true] %s19
      %22 = dma.vmem_to_smem %s20, 16, [#allocation3], [#allocation5]
    $region5: #{encoder_rnn_forward.1} parent=1 // pred_fallthru
      _
    // Predicated region
    $region6: #{encoder_rnn_forward.1} parent=1 // pred_check
      _
    $region7: #{encoder_rnn_forward.1} parent=1 // pred_check_branch
      %24 = sbr.rel (0) target = $region9
    $region8: #{encoder_rnn_forward.1} parent=1 // pred_region
      %s26 = ssub.s32 1024, 1024
      %27 = vsyncadd [#allocation4], %s26
      %s28 = sshll.u32 [#allocation6], 4
      %s29 = int_to_ptr.vmem [resolvable:$true] %s28
      %34 = dma.hbm_to_vmem [thread:$0]  %s1, 1024, %s29, [#allocation4], 128, 128, 8
    $region9: #{encoder_rnn_forward.1} parent=1 // pred_fallthru
      _
    // Predicated region
    $region10: #{encoder_rnn_forward.1} parent=1 // pred_check
      _
    $region11: #{encoder_rnn_forward.1} parent=1 // pred_check_branch
      %36 = sbr.rel (0) target = $region13
    $region12: #{encoder_rnn_forward.1} parent=1 // pred_region
      %s38 = ssub.s32 6144, 6144
      %39 = vsyncadd [#allocation8], %s38
      %s40 = sshll.u32 [#allocation7], 4
      %s41 = int_to_ptr.vmem [resolvable:$true] %s40
      %46 = dma.hbm_to_vmem [thread:$0]  %s2, 6144, %s41, [#allocation8], 384, 384, 24
    $region13: #{encoder_rnn_forward.1} parent=1 // pred_fallthru
      _
    // Predicated region
    $region14: #{encoder_rnn_forward.1} parent=1 // pred_check
      _
    $region15: #{encoder_rnn_forward.1} parent=1 // pred_check_branch
      %48 = sbr.rel (0) target = $region17
    $region16: #{encoder_rnn_forward.1} parent=1 // pred_region
      _
    $region17: #{encoder_rnn_forward.1} parent=1 // pred_fallthru
      _
    // Predicated region
    $region18: #{encoder_rnn_forward.1} parent=1 // pred_check
      _
    $region19: #{encoder_rnn_forward.1} parent=1 // pred_check_branch
      %50 = sbr.rel (0) target = $region21
    $region20: #{encoder_rnn_forward.1} parent=1 // pred_region
      _
    $region21: #{encoder_rnn_forward.1} parent=1 // pred_fallthru
      _
    // Predicated region
    $region22: #{encoder_rnn_forward.1} parent=1 // pred_check
      _
    $region23: #{encoder_rnn_forward.1} parent=1 // pred_check_branch
      %52 = sbr.rel (0) target = $region25
    $region24: #{encoder_rnn_forward.1} parent=1 // pred_region
      %53 = dma.done [#allocation5], 16
    $region25: #{encoder_rnn_forward.1} parent=1 // pred_fallthru
      _
    // Predicated region
    $region26: #{encoder_rnn_forward.1} parent=1 // pred_check
      _
    $region27: #{encoder_rnn_forward.1} parent=1 // pred_check_branch
      %55 = sbr.rel (0) target = $region29
    $region28: #{encoder_rnn_forward.1} parent=1 // pred_region
      %56 = dma.done [#allocation4], 1024
    $region29: #{encoder_rnn_forward.1} parent=1 // pred_fallthru
      _
    // Predicated region
    $region30: #{encoder_rnn_forward.1} parent=1 // pred_check
      _
    $region31: #{encoder_rnn_forward.1} parent=1 // pred_check_branch
      %58 = sbr.rel (0) target = $region33
    $region32: #{encoder_rnn_forward.1} parent=1 // pred_region
      %59 = dma.done [#allocation8], 6144
    $region33: #{encoder_rnn_forward.1} parent=1 // pred_fallthru
      _
    %60 = sfence
    %s62 = sld [smem:[#allocation3]]
    %s63 = scalar_lea.vmem [#allocation6], %s62
    %v64 = vld [vmem:[%s63] sm:$0x1]
    %65 = vst [vmem:[#allocation2] sm:$0x1] %v64
    %s66 = sld [smem:[#allocation3 + $0x1]]
    %s67 = scalar_lea.vmem [#allocation6], %s66
    %v68 = vld [vmem:[%s67] sm:$0x1]
    %69 = vst [vmem:[#allocation2 + $0x1] sm:$0x1] %v68
    %s70 = sld [smem:[#allocation3 + $0x2]]
    %s71 = scalar_lea.vmem [#allocation6], %s70
    %v72 = vld [vmem:[%s71] sm:$0x1]
    %73 = vst [vmem:[#allocation2 + $0x2] sm:$0x1] %v72
    %s74 = sld [smem:[#allocation3 + $0x3]]
    %s75 = scalar_lea.vmem [#allocation6], %s74
    %v76 = vld [vmem:[%s75] sm:$0x1]
    %77 = vst [vmem:[#allocation2 + $0x3] sm:$0x1] %v76
    %s78 = sld [smem:[#allocation3 + $0x4]]
    %s79 = scalar_lea.vmem [#allocation6], %s78
    %v80 = vld [vmem:[%s79] sm:$0x1]
    %81 = vst [vmem:[#allocation2 + $0x4] sm:$0x1] %v80
    %s82 = sld [smem:[#allocation3 + $0x5]]
    %s83 = scalar_lea.vmem [#allocation6], %s82
    %v84 = vld [vmem:[%s83] sm:$0x1]
    %85 = vst [vmem:[#allocation2 + $0x5] sm:$0x1] %v84
    %s86 = sld [smem:[#allocation3 + $0x6]]
    %s87 = scalar_lea.vmem [#allocation6], %s86
    %v88 = vld [vmem:[%s87] sm:$0x1]
    %89 = vst [vmem:[#allocation2 + $0x6] sm:$0x1] %v88
    %s90 = sld [smem:[#allocation3 + $0x7]]
    %s91 = scalar_lea.vmem [#allocation6], %s90
    %v92 = vld [vmem:[%s91] sm:$0x1]
    %93 = vst [vmem:[#allocation2 + $0x7] sm:$0x1] %v92
    %v94 = vld [vmem:[#allocation2] sm:$0xff]
    %v95 = vpack.c.bf16 %v94, %v94
    %v96 = vld [vmem:[#allocation7] sm:$0xff]
    %v97 = vld [vmem:[#allocation7 + $0x8] sm:$0xf]
    %v98 = vld [vmem:[#allocation7 + $0x18] sm:$0xff]
    %v99 = vld [vmem:[#allocation7 + $0x20] sm:$0xf]
    %v100 = vld [vmem:[#allocation7 + $0x30] sm:$0xff]
    %v101 = vld [vmem:[#allocation7 + $0x38] sm:$0xf]
    %v102 = vld [vmem:[#allocation7 + $0x48] sm:$0xff]
    %v103 = vld [vmem:[#allocation7 + $0x50] sm:$0xf]
    %v104 = vld [vmem:[#allocation7 + $0x60] sm:$0xff]
    %v105 = vld [vmem:[#allocation7 + $0x68] sm:$0xf]
    %v106 = vld [vmem:[#allocation7 + $0x78] sm:$0xff]
    %v107 = vld [vmem:[#allocation7 + $0x80] sm:$0xf]
    %v108 = vld [vmem:[#allocation7 + $0x90] sm:$0xff]
    %v109 = vld [vmem:[#allocation7 + $0x98] sm:$0xf]
    %v110 = vld [vmem:[#allocation7 + $0xa8] sm:$0xff]
    %v111 = vld [vmem:[#allocation7 + $0xb0] sm:$0xf]
    %v112 = vld [vmem:[#allocation7 + $0xc0] sm:$0xff]
    %v113 = vld [vmem:[#allocation7 + $0xc8] sm:$0xf]
    %v114 = vld [vmem:[#allocation7 + $0xd8] sm:$0xff]
    %v115 = vld [vmem:[#allocation7 + $0xe0] sm:$0xf]
    %v116 = vld [vmem:[#allocation7 + $0xf0] sm:$0xff]
    %v117 = vld [vmem:[#allocation7 + $0xf8] sm:$0xf]
    %v118 = vld [vmem:[#allocation7 + $0x108] sm:$0xff]
    %v119 = vld [vmem:[#allocation7 + $0x110] sm:$0xf]
    %v120 = vld [vmem:[#allocation7 + $0x120] sm:$0xff]
    %v121 = vld [vmem:[#allocation7 + $0x128] sm:$0xf]
    %v122 = vld [vmem:[#allocation7 + $0x138] sm:$0xff]
    %v123 = vld [vmem:[#allocation7 + $0x140] sm:$0xf]
    %v124 = vld [vmem:[#allocation7 + $0x150] sm:$0xff]
    %v125 = vld [vmem:[#allocation7 + $0x158] sm:$0xf]
    %v126 = vld [vmem:[#allocation7 + $0x168] sm:$0xff]
    %v127 = vld [vmem:[#allocation7 + $0x170] sm:$0xf]
    %v128 = vld [vmem:[#allocation7 + $0xc] sm:$0xff]
    %v129 = vld [vmem:[#allocation7 + $0x14] sm:$0xf]
    %v130 = vld [vmem:[#allocation7 + $0x24] sm:$0xff]
    %v131 = vld [vmem:[#allocation7 + $0x2c] sm:$0xf]
    %v132 = vld [vmem:[#allocation7 + $0x3c] sm:$0xff]
    %v133 = vld [vmem:[#allocation7 + $0x44] sm:$0xf]
    %v134 = vld [vmem:[#allocation7 + $0x54] sm:$0xff]
    %v135 = vld [vmem:[#allocation7 + $0x5c] sm:$0xf]
    %v136 = vld [vmem:[#allocation7 + $0x6c] sm:$0xff]
    %v137 = vld [vmem:[#allocation7 + $0x74] sm:$0xf]
    %v138 = vld [vmem:[#allocation7 + $0x84] sm:$0xff]
    %v139 = vld [vmem:[#allocation7 + $0x8c] sm:$0xf]
    %v140 = vld [vmem:[#allocation7 + $0x9c] sm:$0xff]
    %v141 = vld [vmem:[#allocation7 + $0xa4] sm:$0xf]
    %v142 = vld [vmem:[#allocation7 + $0xb4] sm:$0xff]
    %v143 = vld [vmem:[#allocation7 + $0xbc] sm:$0xf]
    %v144 = vld [vmem:[#allocation7 + $0xcc] sm:$0xff]
    %v145 = vld [vmem:[#allocation7 + $0xd4] sm:$0xf]
    %v146 = vld [vmem:[#allocation7 + $0xe4] sm:$0xff]
    %v147 = vld [vmem:[#allocation7 + $0xec] sm:$0xf]
    %v148 = vld [vmem:[#allocation7 + $0xfc] sm:$0xff]
    %v149 = vld [vmem:[#allocation7 + $0x104] sm:$0xf]
    %v150 = vld [vmem:[#allocation7 + $0x114] sm:$0xff]
    %v151 = vld [vmem:[#allocation7 + $0x11c] sm:$0xf]
    %v152 = vld [vmem:[#allocation7 + $0x12c] sm:$0xff]
    %v153 = vld [vmem:[#allocation7 + $0x134] sm:$0xf]
    %v154 = vld [vmem:[#allocation7 + $0x144] sm:$0xff]
    %v155 = vld [vmem:[#allocation7 + $0x14c] sm:$0xf]
    %v156 = vld [vmem:[#allocation7 + $0x15c] sm:$0xff]
    %v157 = vld [vmem:[#allocation7 + $0x164] sm:$0xf]
    %v158 = vld [vmem:[#allocation7 + $0x174] sm:$0xff]
    %v159 = vld [vmem:[#allocation7 + $0x17c] sm:$0xf]
    %v160 = vld [vmem:[%s3] ss:$2 sm:$0x7]
    %s161 = scalar_lea.vmem %s3, 1
    %v162 = vld [vmem:[%s161] ss:$2 sm:$0x7]
    %v164 = vlaneseq
    %v165 = vshrl.u32 %v164, 7
    %v166 = vsub.s32 0, %v165
    %v167 = vrot.slane %v160, %v166
    %v168 = vlaneseq
    %v169 = vshrl.u32 %v168, 7
    %v170 = vsub.s32 1, %v169
    %v171 = vrot.slane %v160, %v170
    %v172 = vlaneseq
    %v173 = vshrl.u32 %v172, 7
    %v174 = vsub.s32 2, %v173
    %v175 = vrot.slane %v160, %v174
    %v211 = vunpack.c.l.b16 %v96
    %v212 = vunpack.c.h.b16 %v96
    %v213 = vunpack.c.l.b16 %v97
    %v214 = vunpack.c.l.b16 %v98
    %v215 = vunpack.c.h.b16 %v98
    %v216 = vunpack.c.l.b16 %v99
    %v217 = vunpack.c.l.b16 %v100
    %v218 = vunpack.c.h.b16 %v100
    %v219 = vunpack.c.l.b16 %v101
    %v220 = vunpack.c.l.b16 %v102
    %v221 = vunpack.c.h.b16 %v102
    %v222 = vunpack.c.l.b16 %v103
    %v223 = vunpack.c.l.b16 %v104
    %v224 = vunpack.c.h.b16 %v104
    %v225 = vunpack.c.l.b16 %v105
    %v226 = vunpack.c.l.b16 %v106
    %v227 = vunpack.c.h.b16 %v106
    %v228 = vunpack.c.l.b16 %v107
    %v229 = vunpack.c.l.b16 %v108
    %v230 = vunpack.c.h.b16 %v108
    %v231 = vunpack.c.l.b16 %v109
    %v232 = vunpack.c.l.b16 %v110
    %v233 = vunpack.c.h.b16 %v110
    %v234 = vunpack.c.l.b16 %v111
    %v235 = vunpack.c.l.b16 %v112
    %v236 = vunpack.c.h.b16 %v112
    %v237 = vunpack.c.l.b16 %v113
    %v238 = vunpack.c.l.b16 %v114
    %v239 = vunpack.c.h.b16 %v114
    %v240 = vunpack.c.l.b16 %v115
    %v241 = vunpack.c.l.b16 %v116
    %v242 = vunpack.c.h.b16 %v116
    %v243 = vunpack.c.l.b16 %v117
    %v244 = vunpack.c.l.b16 %v118
    %v245 = vunpack.c.h.b16 %v118
    %v246 = vunpack.c.l.b16 %v119
    %v247 = vunpack.c.l.b16 %v120
    %v248 = vunpack.c.h.b16 %v120
    %v249 = vunpack.c.l.b16 %v121
    %v250 = vunpack.c.l.b16 %v122
    %v251 = vunpack.c.h.b16 %v122
    %v252 = vunpack.c.l.b16 %v123
    %v253 = vunpack.c.l.b16 %v124
    %v254 = vunpack.c.h.b16 %v124
    %v255 = vunpack.c.l.b16 %v125
    %v256 = vunpack.c.l.b16 %v126
    %v257 = vunpack.c.h.b16 %v126
    %v258 = vunpack.c.l.b16 %v127
    %v259 = vpack.c.b16 %v214, %v211
    %v260 = vpack.c.b16 %v215, %v212
    %v261 = vpack.c.b16 %v216, %v213
    %v262 = vpack.c.b16 %v220, %v217
    %v263 = vpack.c.b16 %v221, %v218
    %v264 = vpack.c.b16 %v222, %v219
    %v265 = vpack.c.b16 %v226, %v223
    %v266 = vpack.c.b16 %v227, %v224
    %v267 = vpack.c.b16 %v228, %v225
    %v268 = vpack.c.b16 %v232, %v229
    %v269 = vpack.c.b16 %v233, %v230
    %v270 = vpack.c.b16 %v234, %v231
    %v271 = vpack.c.b16 %v238, %v235
    %v272 = vpack.c.b16 %v239, %v236
    %v273 = vpack.c.b16 %v240, %v237
    %v274 = vpack.c.b16 %v244, %v241
    %v275 = vpack.c.b16 %v245, %v242
    %v276 = vpack.c.b16 %v246, %v243
    %v277 = vpack.c.b16 %v250, %v247
    %v278 = vpack.c.b16 %v251, %v248
    %v279 = vpack.c.b16 %v252, %v249
    %v280 = vpack.c.b16 %v256, %v253
    %v281 = vpack.c.b16 %v257, %v254
    %v282 = vpack.c.b16 %v258, %v255
    %307 = vmatprep.subr.bf16.mxu0 %v260
    %308 = vmatpush1.bf16.msra.mxu0 %v259
    %309 = vmatprep.subr.bf16.mxu0 %v263
    %310 = vmatpush1.bf16.msra.mxu0 %v262
    %311 = vmatprep.subr.bf16.mxu0 %v266
    %312 = vmatpush1.bf16.msra.mxu0 %v265
    %313 = vmatprep.subr.bf16.mxu0 %v269
    %314 = vmatpush1.bf16.msra.mxu0 %v268
    %315 = vmatprep.subr.bf16.mxu0 %v272
    %316 = vmatpush1.bf16.msra.mxu0 %v271
    %317 = vmatprep.subr.bf16.mxu0 %v275
    %318 = vmatpush1.bf16.msra.mxu0 %v274
    %319 = vmatprep.subr.bf16.mxu0 %v278
    %320 = vmatpush1.bf16.msra.mxu0 %v277
    %321 = vmatprep.subr.bf16.mxu0 %v281
    %322 = vmatpush1.bf16.msra.mxu0 %v280
    %323 = vmatprep.subr.bf16.mxu0 0
    %324 = vmatpush1.bf16.msra.mxu0 0
    %325 = vmatprep.subr.bf16.mxu0 0
    %326 = vmatpush1.bf16.msra.mxu0 0
    %327 = vmatprep.subr.bf16.mxu0 0
    %328 = vmatpush1.bf16.msra.mxu0 0
    %329 = vmatprep.subr.bf16.mxu0 0
    %330 = vmatpush1.bf16.msra.mxu0 0
    %331 = vmatprep.subr.bf16.mxu0 0
    %332 = vmatpush1.bf16.msra.mxu0 0
    %333 = vmatprep.subr.bf16.mxu0 0
    %334 = vmatpush1.bf16.msra.mxu0 0
    %335 = vmatprep.subr.bf16.mxu0 0
    %336 = vmatpush1.bf16.msra.mxu0 0
    %337 = vmatprep.subr.bf16.mxu0 0
    %338 = vmatpush1.bf16.msra.mxu0 0
    %339 = vmatprep.mubr.bf16.mxu0 0
    %340 = vmatmul.mubr.bf16.gmra.mrb[0].mxu0 %v95
    %v341 = vpop.f32.mrb[0].mxu0
    %v342 = vadd.f32 %v167, %v341
    %v343 = vpop.f32.mrb[0].mxu0
    %v344 = vadd.f32 %v171, %v343
    %v345 = vpop.f32.mrb[0].mxu0
    %v346 = vpop.f32.mrb[0].mxu0
    %347 = vdwg.mxu0
    %348 = vmatprep.subr.bf16.mxu0 0
    %349 = vmatpush1.bf16.msra.mxu0 %v261
    %350 = vmatprep.subr.bf16.mxu0 0
    %351 = vmatpush1.bf16.msra.mxu0 %v264
    %352 = vmatprep.subr.bf16.mxu0 0
    %353 = vmatpush1.bf16.msra.mxu0 %v267
    %354 = vmatprep.subr.bf16.mxu0 0
    %355 = vmatpush1.bf16.msra.mxu0 %v270
    %356 = vmatprep.subr.bf16.mxu0 0
    %357 = vmatpush1.bf16.msra.mxu0 %v273
    %358 = vmatprep.subr.bf16.mxu0 0
    %359 = vmatpush1.bf16.msra.mxu0 %v276
    %360 = vmatprep.subr.bf16.mxu0 0
    %361 = vmatpush1.bf16.msra.mxu0 %v279
    %362 = vmatprep.subr.bf16.mxu0 0
    %363 = vmatpush1.bf16.msra.mxu0 %v282
    %364 = vmatprep.subr.bf16.mxu0 0
    %365 = vmatpush1.bf16.msra.mxu0 0
    %366 = vmatprep.subr.bf16.mxu0 0
    %367 = vmatpush1.bf16.msra.mxu0 0
    %368 = vmatprep.subr.bf16.mxu0 0
    %369 = vmatpush1.bf16.msra.mxu0 0
    %370 = vmatprep.subr.bf16.mxu0 0
    %371 = vmatpush1.bf16.msra.mxu0 0
    %372 = vmatprep.subr.bf16.mxu0 0
    %373 = vmatpush1.bf16.msra.mxu0 0
    %374 = vmatprep.subr.bf16.mxu0 0
    %375 = vmatpush1.bf16.msra.mxu0 0
    %376 = vmatprep.subr.bf16.mxu0 0
    %377 = vmatpush1.bf16.msra.mxu0 0
    %378 = vmatprep.subr.bf16.mxu0 0
    %379 = vmatpush1.bf16.msra.mxu0 0
    %380 = vmatprep.mubr.bf16.mxu0 0
    %381 = vmatmul.mubr.bf16.gmra.mrb[0].mxu0 %v95
    %v382 = vpop.f32.mrb[0].mxu0
    %v383 = vadd.f32 %v175, %v382
    %v384 = vpop.f32.mrb[0].mxu0
    %v385 = vpop.f32.mrb[0].mxu0
    %v386 = vpop.f32.mrb[0].mxu0
    %387 = vdwg.mxu0
    %v388 = vld [vmem:[%s4] sm:$0x1]
    %v389 = vpack.c.bf16 %v388, %v388
    %v422 = vunpack.c.l.b16 %v128
    %v423 = vunpack.c.h.b16 %v128
    %v424 = vunpack.c.l.b16 %v129
    %v425 = vunpack.c.l.b16 %v130
    %v426 = vunpack.c.h.b16 %v130
    %v427 = vunpack.c.l.b16 %v131
    %v428 = vunpack.c.l.b16 %v132
    %v429 = vunpack.c.h.b16 %v132
    %v430 = vunpack.c.l.b16 %v133
    %v431 = vunpack.c.l.b16 %v134
    %v432 = vunpack.c.h.b16 %v134
    %v433 = vunpack.c.l.b16 %v135
    %v434 = vunpack.c.l.b16 %v136
    %v435 = vunpack.c.h.b16 %v136
    %v436 = vunpack.c.l.b16 %v137
    %v437 = vunpack.c.l.b16 %v138
    %v438 = vunpack.c.h.b16 %v138
    %v439 = vunpack.c.l.b16 %v139
    %v440 = vunpack.c.l.b16 %v140
    %v441 = vunpack.c.h.b16 %v140
    %v442 = vunpack.c.l.b16 %v141
    %v443 = vunpack.c.l.b16 %v142
    %v444 = vunpack.c.h.b16 %v142
    %v445 = vunpack.c.l.b16 %v143
    %v446 = vunpack.c.l.b16 %v144
    %v447 = vunpack.c.h.b16 %v144
    %v448 = vunpack.c.l.b16 %v145
    %v449 = vunpack.c.l.b16 %v146
    %v450 = vunpack.c.h.b16 %v146
    %v451 = vunpack.c.l.b16 %v147
    %v452 = vunpack.c.l.b16 %v148
    %v453 = vunpack.c.h.b16 %v148
    %v454 = vunpack.c.l.b16 %v149
    %v455 = vunpack.c.l.b16 %v150
    %v456 = vunpack.c.h.b16 %v150
    %v457 = vunpack.c.l.b16 %v151
    %v458 = vunpack.c.l.b16 %v152
    %v459 = vunpack.c.h.b16 %v152
    %v460 = vunpack.c.l.b16 %v153
    %v461 = vunpack.c.l.b16 %v154
    %v462 = vunpack.c.h.b16 %v154
    %v463 = vunpack.c.l.b16 %v155
    %v464 = vunpack.c.l.b16 %v156
    %v465 = vunpack.c.h.b16 %v156
    %v466 = vunpack.c.l.b16 %v157
    %v467 = vunpack.c.l.b16 %v158
    %v468 = vunpack.c.h.b16 %v158
    %v469 = vunpack.c.l.b16 %v159
    %v470 = vpack.c.b16 %v425, %v422
    %v471 = vpack.c.b16 %v426, %v423
    %v472 = vpack.c.b16 %v427, %v424
    %v473 = vpack.c.b16 %v431, %v428
    %v474 = vpack.c.b16 %v432, %v429
    %v475 = vpack.c.b16 %v433, %v430
    %v476 = vpack.c.b16 %v437, %v434
    %v477 = vpack.c.b16 %v438, %v435
    %v478 = vpack.c.b16 %v439, %v436
    %v479 = vpack.c.b16 %v443, %v440
    %v480 = vpack.c.b16 %v444, %v441
    %v481 = vpack.c.b16 %v445, %v442
    %v482 = vpack.c.b16 %v449, %v446
    %v483 = vpack.c.b16 %v450, %v447
    %v484 = vpack.c.b16 %v451, %v448
    %v485 = vpack.c.b16 %v455, %v452
    %v486 = vpack.c.b16 %v456, %v453
    %v487 = vpack.c.b16 %v457, %v454
    %v488 = vpack.c.b16 %v461, %v458
    %v489 = vpack.c.b16 %v462, %v459
    %v490 = vpack.c.b16 %v463, %v460
    %v491 = vpack.c.b16 %v467, %v464
    %v492 = vpack.c.b16 %v468, %v465
    %v493 = vpack.c.b16 %v469, %v466
    %v519 = vlaneseq
    %v520 = vshrl.u32 %v519, 7
    %v521 = vsub.s32 0, %v520
    %v522 = vrot.slane %v162, %v521
    %v523 = vlaneseq
    %v524 = vshrl.u32 %v523, 7
    %v525 = vsub.s32 1, %v524
    %v526 = vrot.slane %v162, %v525
    %v527 = vlaneseq
    %v528 = vshrl.u32 %v527, 7
    %v529 = vsub.s32 2, %v528
    %v530 = vrot.slane %v162, %v529
    %534 = vmatprep.subr.bf16.mxu0 %v471
    %535 = vmatpush1.bf16.msra.mxu0 %v470
    %536 = vmatprep.subr.bf16.mxu0 %v474
    %537 = vmatpush1.bf16.msra.mxu0 %v473
    %538 = vmatprep.subr.bf16.mxu0 %v477
    %539 = vmatpush1.bf16.msra.mxu0 %v476
    %540 = vmatprep.subr.bf16.mxu0 %v480
    %541 = vmatpush1.bf16.msra.mxu0 %v479
    %542 = vmatprep.subr.bf16.mxu0 %v483
    %543 = vmatpush1.bf16.msra.mxu0 %v482
    %544 = vmatprep.subr.bf16.mxu0 %v486
    %545 = vmatpush1.bf16.msra.mxu0 %v485
    %546 = vmatprep.subr.bf16.mxu0 %v489
    %547 = vmatpush1.bf16.msra.mxu0 %v488
    %548 = vmatprep.subr.bf16.mxu0 %v492
    %549 = vmatpush1.bf16.msra.mxu0 %v491
    %550 = vmatprep.subr.bf16.mxu0 0
    %551 = vmatpush1.bf16.msra.mxu0 0
    %552 = vmatprep.subr.bf16.mxu0 0
    %553 = vmatpush1.bf16.msra.mxu0 0
    %554 = vmatprep.subr.bf16.mxu0 0
    %555 = vmatpush1.bf16.msra.mxu0 0
    %556 = vmatprep.subr.bf16.mxu0 0
    %557 = vmatpush1.bf16.msra.mxu0 0
    %558 = vmatprep.subr.bf16.mxu0 0
    %559 = vmatpush1.bf16.msra.mxu0 0
    %560 = vmatprep.subr.bf16.mxu0 0
    %561 = vmatpush1.bf16.msra.mxu0 0
    %562 = vmatprep.subr.bf16.mxu0 0
    %563 = vmatpush1.bf16.msra.mxu0 0
    %564 = vmatprep.subr.bf16.mxu0 0
    %565 = vmatpush1.bf16.msra.mxu0 0
    %566 = vmatprep.mubr.bf16.mxu0 0
    %567 = vmatmul.mubr.bf16.gmra.mrb[0].mxu0 %v389
    %v568 = vpop.f32.mrb[0].mxu0
    %v569 = vadd.f32 %v522, %v568
    %v570 = vpop.f32.mrb[0].mxu0
    %v571 = vadd.f32 %v526, %v570
    %v572 = vpop.f32.mrb[0].mxu0
    %v573 = vpop.f32.mrb[0].mxu0
    %574 = vdwg.mxu0
    %575 = vmatprep.subr.bf16.mxu0 0
    %576 = vmatpush1.bf16.msra.mxu0 %v472
    %577 = vmatprep.subr.bf16.mxu0 0
    %578 = vmatpush1.bf16.msra.mxu0 %v475
    %579 = vmatprep.subr.bf16.mxu0 0
    %580 = vmatpush1.bf16.msra.mxu0 %v478
    %581 = vmatprep.subr.bf16.mxu0 0
    %582 = vmatpush1.bf16.msra.mxu0 %v481
    %583 = vmatprep.subr.bf16.mxu0 0
    %584 = vmatpush1.bf16.msra.mxu0 %v484
    %585 = vmatprep.subr.bf16.mxu0 0
    %586 = vmatpush1.bf16.msra.mxu0 %v487
    %587 = vmatprep.subr.bf16.mxu0 0
    %588 = vmatpush1.bf16.msra.mxu0 %v490
    %589 = vmatprep.subr.bf16.mxu0 0
    %590 = vmatpush1.bf16.msra.mxu0 %v493
    %591 = vmatprep.subr.bf16.mxu0 0
    %592 = vmatpush1.bf16.msra.mxu0 0
    %593 = vmatprep.subr.bf16.mxu0 0
    %594 = vmatpush1.bf16.msra.mxu0 0
    %595 = vmatprep.subr.bf16.mxu0 0
    %596 = vmatpush1.bf16.msra.mxu0 0
    %597 = vmatprep.subr.bf16.mxu0 0
    %598 = vmatpush1.bf16.msra.mxu0 0
    %599 = vmatprep.subr.bf16.mxu0 0
    %600 = vmatpush1.bf16.msra.mxu0 0
    %601 = vmatprep.subr.bf16.mxu0 0
    %602 = vmatpush1.bf16.msra.mxu0 0
    %603 = vmatprep.subr.bf16.mxu0 0
    %604 = vmatpush1.bf16.msra.mxu0 0
    %605 = vmatprep.subr.bf16.mxu0 0
    %606 = vmatpush1.bf16.msra.mxu0 0
    %607 = vmatprep.mubr.bf16.mxu0 0
    %608 = vmatmul.mubr.bf16.gmra.mrb[0].mxu0 %v389
    %v609 = vpop.f32.mrb[0].mxu0
    %v610 = vadd.f32 %v530, %v609
    %v611 = vpop.f32.mrb[0].mxu0
    %v612 = vpop.f32.mrb[0].mxu0
    %v613 = vpop.f32.mrb[0].mxu0
    %614 = vdwg.mxu0
    %v615 = vadd.f32 %v342, %v569
    %v616 = vadd.f32 %v344, %v571
    %v617 = vxor.u32 %v615, 2147483648
    %v618 = vxor.u32 %v616, 2147483648
    %v619 = vmul.f32 %v617, 1.442695
    %v620 = vpow.pop %v619
    %v621 = vmul.f32 %v618, 1.442695
    %v622 = vpow.pop %v621
    %v623 = vadd.f32 %v620, 1.0
    %v624 = vadd.f32 %v622, 1.0
    %v625 = vrcp.pop %v623
    %v626 = vmul.f32 1.0, %v625
    %v627 = vrcp.pop %v624
    %v628 = vmul.f32 1.0, %v627
    %v629 = vmul.f32 %v626, %v610
    %v630 = vadd.f32 %v383, %v629
    %v631 = vtanh.pop %v630
    %v632 = vsub.f32 %v388, %v631
    %v633 = vmul.f32 %v628, %v632
    %v634 = vadd.f32 %v631, %v633
    %635 = vst [vmem:[%s5] sm:$0x1] %v634
    %v636 = vpack.c.bf16 %v634, %v634
    %637 = vmatprep.subr.bf16.mxu0 %v471
    %638 = vmatpush1.bf16.msra.mxu0 %v470
    %639 = vmatprep.subr.bf16.mxu0 %v474
    %640 = vmatpush1.bf16.msra.mxu0 %v473
    %641 = vmatprep.subr.bf16.mxu0 %v477
    %642 = vmatpush1.bf16.msra.mxu0 %v476
    %643 = vmatprep.subr.bf16.mxu0 %v480
    %644 = vmatpush1.bf16.msra.mxu0 %v479
    %645 = vmatprep.subr.bf16.mxu0 %v483
    %646 = vmatpush1.bf16.msra.mxu0 %v482
    %647 = vmatprep.subr.bf16.mxu0 %v486
    %648 = vmatpush1.bf16.msra.mxu0 %v485
    %649 = vmatprep.subr.bf16.mxu0 %v489
    %650 = vmatpush1.bf16.msra.mxu0 %v488
    %651 = vmatprep.subr.bf16.mxu0 %v492
    %652 = vmatpush1.bf16.msra.mxu0 %v491
    %653 = vmatprep.subr.bf16.mxu0 0
    %654 = vmatpush1.bf16.msra.mxu0 0
    %655 = vmatprep.subr.bf16.mxu0 0
    %656 = vmatpush1.bf16.msra.mxu0 0
    %657 = vmatprep.subr.bf16.mxu0 0
    %658 = vmatpush1.bf16.msra.mxu0 0
    %659 = vmatprep.subr.bf16.mxu0 0
    %660 = vmatpush1.bf16.msra.mxu0 0
    %661 = vmatprep.subr.bf16.mxu0 0
    %662 = vmatpush1.bf16.msra.mxu0 0
    %663 = vmatprep.subr.bf16.mxu0 0
    %664 = vmatpush1.bf16.msra.mxu0 0
    %665 = vmatprep.subr.bf16.mxu0 0
    %666 = vmatpush1.bf16.msra.mxu0 0
    %667 = vmatprep.subr.bf16.mxu0 0
    %668 = vmatpush1.bf16.msra.mxu0 0
    %669 = vmatprep.mubr.bf16.mxu0 0
    %670 = vmatmul.mubr.bf16.gmra.mrb[0].mxu0 %v636
    %v671 = vpop.f32.mrb[0].mxu0
    %v672 = vadd.f32 %v522, %v671
    %v673 = vpop.f32.mrb[0].mxu0
    %v674 = vadd.f32 %v526, %v673
    %v675 = vpop.f32.mrb[0].mxu0
    %v676 = vpop.f32.mrb[0].mxu0
    %677 = vdwg.mxu0
    %678 = vmatprep.subr.bf16.mxu0 0
    %679 = vmatpush1.bf16.msra.mxu0 %v472
    %680 = vmatprep.subr.bf16.mxu0 0
    %681 = vmatpush1.bf16.msra.mxu0 %v475
    %682 = vmatprep.subr.bf16.mxu0 0
    %683 = vmatpush1.bf16.msra.mxu0 %v478
    %684 = vmatprep.subr.bf16.mxu0 0
    %685 = vmatpush1.bf16.msra.mxu0 %v481
    %686 = vmatprep.subr.bf16.mxu0 0
    %687 = vmatpush1.bf16.msra.mxu0 %v484
    %688 = vmatprep.subr.bf16.mxu0 0
    %689 = vmatpush1.bf16.msra.mxu0 %v487
    %690 = vmatprep.subr.bf16.mxu0 0
    %691 = vmatpush1.bf16.msra.mxu0 %v490
    %692 = vmatprep.subr.bf16.mxu0 0
    %693 = vmatpush1.bf16.msra.mxu0 %v493
    %694 = vmatprep.subr.bf16.mxu0 0
    %695 = vmatpush1.bf16.msra.mxu0 0
    %696 = vmatprep.subr.bf16.mxu0 0
    %697 = vmatpush1.bf16.msra.mxu0 0
    %698 = vmatprep.subr.bf16.mxu0 0
    %699 = vmatpush1.bf16.msra.mxu0 0
    %700 = vmatprep.subr.bf16.mxu0 0
    %701 = vmatpush1.bf16.msra.mxu0 0
    %702 = vmatprep.subr.bf16.mxu0 0
    %703 = vmatpush1.bf16.msra.mxu0 0
    %704 = vmatprep.subr.bf16.mxu0 0
    %705 = vmatpush1.bf16.msra.mxu0 0
    %706 = vmatprep.subr.bf16.mxu0 0
    %707 = vmatpush1.bf16.msra.mxu0 0
    %708 = vmatprep.subr.bf16.mxu0 0
    %709 = vmatpush1.bf16.msra.mxu0 0
    %710 = vmatprep.mubr.bf16.mxu0 0
    %711 = vmatmul.mubr.bf16.gmra.mrb[0].mxu0 %v636
    %v712 = vpop.f32.mrb[0].mxu0
    %v713 = vadd.f32 %v530, %v712
    %v714 = vpop.f32.mrb[0].mxu0
    %v715 = vpop.f32.mrb[0].mxu0
    %v716 = vpop.f32.mrb[0].mxu0
    %717 = vdwg.mxu0
    %v720 = vrot.slane %v672, 7
    %v721 = vrot.slane %v674, 7
    %v724 = vadd.f32 %v342, %v720
    %v725 = vadd.f32 %v344, %v721
    %v726 = vxor.u32 %v724, 2147483648
    %v727 = vxor.u32 %v725, 2147483648
    %v728 = vmul.f32 %v726, 1.442695
    %v729 = vpow.pop %v728
    %v730 = vmul.f32 %v727, 1.442695
    %v731 = vpow.pop %v730
    %v732 = vadd.f32 %v729, 1.0
    %v733 = vadd.f32 %v731, 1.0
    %v734 = vrcp.pop %v732
    %v735 = vmul.f32 1.0, %v734
    %v736 = vrcp.pop %v733
    %v737 = vmul.f32 1.0, %v736
    %v739 = vrot.slane %v713, 7
    %v741 = vmul.f32 %v735, %v739
    %v742 = vadd.f32 %v383, %v741
    %v743 = vtanh.pop %v742
    %v745 = vrot.slane %v743, 1
    %v747 = vsub.f32 %v634, %v745
    %v749 = vrot.slane %v747, 7
    %v751 = vmul.f32 %v737, %v749
    %v752 = vadd.f32 %v743, %v751
    %753 = vst [vmem:[%s5] sm:$0x2] %v752
    %v754 = vpack.c.bf16 %v752, %v752
    %v756 = vshrl.u32 %v754, 16
    %759 = vmatprep.subr.bf16.mxu0 %v471
    %760 = vmatpush1.bf16.msra.mxu0 %v470
    %761 = vmatprep.subr.bf16.mxu0 %v474
    %762 = vmatpush1.bf16.msra.mxu0 %v473
    %763 = vmatprep.subr.bf16.mxu0 %v477
    %764 = vmatpush1.bf16.msra.mxu0 %v476
    %765 = vmatprep.subr.bf16.mxu0 %v480
    %766 = vmatpush1.bf16.msra.mxu0 %v479
    %767 = vmatprep.subr.bf16.mxu0 %v483
    %768 = vmatpush1.bf16.msra.mxu0 %v482
    %769 = vmatprep.subr.bf16.mxu0 %v486
    %770 = vmatpush1.bf16.msra.mxu0 %v485
    %771 = vmatprep.subr.bf16.mxu0 %v489
    %772 = vmatpush1.bf16.msra.mxu0 %v488
    %773 = vmatprep.subr.bf16.mxu0 %v492
    %774 = vmatpush1.bf16.msra.mxu0 %v491
    %775 = vmatprep.subr.bf16.mxu0 0
    %776 = vmatpush1.bf16.msra.mxu0 0
    %777 = vmatprep.subr.bf16.mxu0 0
    %778 = vmatpush1.bf16.msra.mxu0 0
    %779 = vmatprep.subr.bf16.mxu0 0
    %780 = vmatpush1.bf16.msra.mxu0 0
    %781 = vmatprep.subr.bf16.mxu0 0
    %782 = vmatpush1.bf16.msra.mxu0 0
    %783 = vmatprep.subr.bf16.mxu0 0
    %784 = vmatpush1.bf16.msra.mxu0 0
    %785 = vmatprep.subr.bf16.mxu0 0
    %786 = vmatpush1.bf16.msra.mxu0 0
    %787 = vmatprep.subr.bf16.mxu0 0
    %788 = vmatpush1.bf16.msra.mxu0 0
    %789 = vmatprep.subr.bf16.mxu0 0
    %790 = vmatpush1.bf16.msra.mxu0 0
    %791 = vmatprep.mubr.bf16.mxu0 0
    %792 = vmatmul.mubr.bf16.gmra.mrb[0].mxu0 %v756
    %v793 = vpop.f32.mrb[0].mxu0
    %v794 = vadd.f32 %v522, %v793
    %v795 = vpop.f32.mrb[0].mxu0
    %v796 = vadd.f32 %v526, %v795
    %v797 = vpop.f32.mrb[0].mxu0
    %v798 = vpop.f32.mrb[0].mxu0
    %799 = vdwg.mxu0
    %800 = vmatprep.subr.bf16.mxu0 0
    %801 = vmatpush1.bf16.msra.mxu0 %v472
    %802 = vmatprep.subr.bf16.mxu0 0
    %803 = vmatpush1.bf16.msra.mxu0 %v475
    %804 = vmatprep.subr.bf16.mxu0 0
    %805 = vmatpush1.bf16.msra.mxu0 %v478
    %806 = vmatprep.subr.bf16.mxu0 0
    %807 = vmatpush1.bf16.msra.mxu0 %v481
    %808 = vmatprep.subr.bf16.mxu0 0
    %809 = vmatpush1.bf16.msra.mxu0 %v484
    %810 = vmatprep.subr.bf16.mxu0 0
    %811 = vmatpush1.bf16.msra.mxu0 %v487
    %812 = vmatprep.subr.bf16.mxu0 0
    %813 = vmatpush1.bf16.msra.mxu0 %v490
    %814 = vmatprep.subr.bf16.mxu0 0
    %815 = vmatpush1.bf16.msra.mxu0 %v493
    %816 = vmatprep.subr.bf16.mxu0 0
    %817 = vmatpush1.bf16.msra.mxu0 0
    %818 = vmatprep.subr.bf16.mxu0 0
    %819 = vmatpush1.bf16.msra.mxu0 0
    %820 = vmatprep.subr.bf16.mxu0 0
    %821 = vmatpush1.bf16.msra.mxu0 0
    %822 = vmatprep.subr.bf16.mxu0 0
    %823 = vmatpush1.bf16.msra.mxu0 0
    %824 = vmatprep.subr.bf16.mxu0 0
    %825 = vmatpush1.bf16.msra.mxu0 0
    %826 = vmatprep.subr.bf16.mxu0 0
    %827 = vmatpush1.bf16.msra.mxu0 0
    %828 = vmatprep.subr.bf16.mxu0 0
    %829 = vmatpush1.bf16.msra.mxu0 0
    %830 = vmatprep.subr.bf16.mxu0 0
    %831 = vmatpush1.bf16.msra.mxu0 0
    %832 = vmatprep.mubr.bf16.mxu0 0
    %833 = vmatmul.mubr.bf16.gmra.mrb[0].mxu0 %v756
    %v834 = vpop.f32.mrb[0].mxu0
    %v835 = vadd.f32 %v530, %v834
    %v836 = vpop.f32.mrb[0].mxu0
    %v837 = vpop.f32.mrb[0].mxu0
    %v838 = vpop.f32.mrb[0].mxu0
    %839 = vdwg.mxu0
    %v842 = vrot.slane %v794, 6
    %v843 = vrot.slane %v796, 6
    %v846 = vadd.f32 %v342, %v842
    %v847 = vadd.f32 %v344, %v843
    %v848 = vxor.u32 %v846, 2147483648
    %v849 = vxor.u32 %v847, 2147483648
    %v850 = vmul.f32 %v848, 1.442695
    %v851 = vpow.pop %v850
    %v852 = vmul.f32 %v849, 1.442695
    %v853 = vpow.pop %v852
    %v854 = vadd.f32 %v851, 1.0
    %v855 = vadd.f32 %v853, 1.0
    %v856 = vrcp.pop %v854
    %v857 = vmul.f32 1.0, %v856
    %v858 = vrcp.pop %v855
    %v859 = vmul.f32 1.0, %v858
    %v861 = vrot.slane %v835, 6
    %v863 = vmul.f32 %v857, %v861
    %v864 = vadd.f32 %v383, %v863
    %v865 = vtanh.pop %v864
    %v867 = vrot.slane %v865, 1
    %v869 = vsub.f32 %v752, %v867
    %v871 = vrot.slane %v869, 7
    %v873 = vmul.f32 %v859, %v871
    %v874 = vadd.f32 %v865, %v873
    %875 = vst [vmem:[%s5] sm:$0x4] %v874
    %v876 = vpack.c.bf16 %v874, %v874
    %v878 = vrot.slane %v876, 1
    %880 = vmatprep.subr.bf16.mxu0 %v471
    %881 = vmatpush1.bf16.msra.mxu0 %v470
    %882 = vmatprep.subr.bf16.mxu0 %v474
    %883 = vmatpush1.bf16.msra.mxu0 %v473
    %884 = vmatprep.subr.bf16.mxu0 %v477
    %885 = vmatpush1.bf16.msra.mxu0 %v476
    %886 = vmatprep.subr.bf16.mxu0 %v480
    %887 = vmatpush1.bf16.msra.mxu0 %v479
    %888 = vmatprep.subr.bf16.mxu0 %v483
    %889 = vmatpush1.bf16.msra.mxu0 %v482
    %890 = vmatprep.subr.bf16.mxu0 %v486
    %891 = vmatpush1.bf16.msra.mxu0 %v485
    %892 = vmatprep.subr.bf16.mxu0 %v489
    %893 = vmatpush1.bf16.msra.mxu0 %v488
    %894 = vmatprep.subr.bf16.mxu0 %v492
    %895 = vmatpush1.bf16.msra.mxu0 %v491
    %896 = vmatprep.subr.bf16.mxu0 0
    %897 = vmatpush1.bf16.msra.mxu0 0
    %898 = vmatprep.subr.bf16.mxu0 0
    %899 = vmatpush1.bf16.msra.mxu0 0
    %900 = vmatprep.subr.bf16.mxu0 0
    %901 = vmatpush1.bf16.msra.mxu0 0
    %902 = vmatprep.subr.bf16.mxu0 0
    %903 = vmatpush1.bf16.msra.mxu0 0
    %904 = vmatprep.subr.bf16.mxu0 0
    %905 = vmatpush1.bf16.msra.mxu0 0
    %906 = vmatprep.subr.bf16.mxu0 0
    %907 = vmatpush1.bf16.msra.mxu0 0
    %908 = vmatprep.subr.bf16.mxu0 0
    %909 = vmatpush1.bf16.msra.mxu0 0
    %910 = vmatprep.subr.bf16.mxu0 0
    %911 = vmatpush1.bf16.msra.mxu0 0
    %912 = vmatprep.mubr.bf16.mxu0 0
    %913 = vmatmul.mubr.bf16.gmra.mrb[0].mxu0 %v878
    %v914 = vpop.f32.mrb[0].mxu0
    %v915 = vadd.f32 %v522, %v914
    %v916 = vpop.f32.mrb[0].mxu0
    %v917 = vadd.f32 %v526, %v916
    %v918 = vpop.f32.mrb[0].mxu0
    %v919 = vpop.f32.mrb[0].mxu0
    %920 = vdwg.mxu0
    %921 = vmatprep.subr.bf16.mxu0 0
    %922 = vmatpush1.bf16.msra.mxu0 %v472
    %923 = vmatprep.subr.bf16.mxu0 0
    %924 = vmatpush1.bf16.msra.mxu0 %v475
    %925 = vmatprep.subr.bf16.mxu0 0
    %926 = vmatpush1.bf16.msra.mxu0 %v478
    %927 = vmatprep.subr.bf16.mxu0 0
    %928 = vmatpush1.bf16.msra.mxu0 %v481
    %929 = vmatprep.subr.bf16.mxu0 0
    %930 = vmatpush1.bf16.msra.mxu0 %v484
    %931 = vmatprep.subr.bf16.mxu0 0
    %932 = vmatpush1.bf16.msra.mxu0 %v487
    %933 = vmatprep.subr.bf16.mxu0 0
    %934 = vmatpush1.bf16.msra.mxu0 %v490
    %935 = vmatprep.subr.bf16.mxu0 0
    %936 = vmatpush1.bf16.msra.mxu0 %v493
    %937 = vmatprep.subr.bf16.mxu0 0
    %938 = vmatpush1.bf16.msra.mxu0 0
    %939 = vmatprep.subr.bf16.mxu0 0
    %940 = vmatpush1.bf16.msra.mxu0 0
    %941 = vmatprep.subr.bf16.mxu0 0
    %942 = vmatpush1.bf16.msra.mxu0 0
    %943 = vmatprep.subr.bf16.mxu0 0
    %944 = vmatpush1.bf16.msra.mxu0 0
    %945 = vmatprep.subr.bf16.mxu0 0
    %946 = vmatpush1.bf16.msra.mxu0 0
    %947 = vmatprep.subr.bf16.mxu0 0
    %948 = vmatpush1.bf16.msra.mxu0 0
    %949 = vmatprep.subr.bf16.mxu0 0
    %950 = vmatpush1.bf16.msra.mxu0 0
    %951 = vmatprep.subr.bf16.mxu0 0
    %952 = vmatpush1.bf16.msra.mxu0 0
    %953 = vmatprep.mubr.bf16.mxu0 0
    %954 = vmatmul.mubr.bf16.gmra.mrb[0].mxu0 %v878
    %v955 = vpop.f32.mrb[0].mxu0
    %v956 = vadd.f32 %v530, %v955
    %v957 = vpop.f32.mrb[0].mxu0
    %v958 = vpop.f32.mrb[0].mxu0
    %v959 = vpop.f32.mrb[0].mxu0
    %960 = vdwg.mxu0
    %v963 = vrot.slane %v915, 5
    %v964 = vrot.slane %v917, 5
    %v967 = vadd.f32 %v342, %v963
    %v968 = vadd.f32 %v344, %v964
    %v969 = vxor.u32 %v967, 2147483648
    %v970 = vxor.u32 %v968, 2147483648
    %v971 = vmul.f32 %v969, 1.442695
    %v972 = vpow.pop %v971
    %v973 = vmul.f32 %v970, 1.442695
    %v974 = vpow.pop %v973
    %v975 = vadd.f32 %v972, 1.0
    %v976 = vadd.f32 %v974, 1.0
    %v977 = vrcp.pop %v975
    %v978 = vmul.f32 1.0, %v977
    %v979 = vrcp.pop %v976
    %v980 = vmul.f32 1.0, %v979
    %v982 = vrot.slane %v956, 5
    %v984 = vmul.f32 %v978, %v982
    %v985 = vadd.f32 %v383, %v984
    %v986 = vtanh.pop %v985
    %v988 = vrot.slane %v986, 1
    %v990 = vsub.f32 %v874, %v988
    %v992 = vrot.slane %v990, 7
    %v994 = vmul.f32 %v980, %v992
    %v995 = vadd.f32 %v986, %v994
    %996 = vst [vmem:[%s5] sm:$0x8] %v995
    %v997 = vpack.c.bf16 %v995, %v995
    %v999 = vshrl.u32 %v997, 16
    %v1001 = vrot.slane %v999, 1
    %1003 = vmatprep.subr.bf16.mxu0 %v471
    %1004 = vmatpush1.bf16.msra.mxu0 %v470
    %1005 = vmatprep.subr.bf16.mxu0 %v474
    %1006 = vmatpush1.bf16.msra.mxu0 %v473
    %1007 = vmatprep.subr.bf16.mxu0 %v477
    %1008 = vmatpush1.bf16.msra.mxu0 %v476
    %1009 = vmatprep.subr.bf16.mxu0 %v480
    %1010 = vmatpush1.bf16.msra.mxu0 %v479
    %1011 = vmatprep.subr.bf16.mxu0 %v483
    %1012 = vmatpush1.bf16.msra.mxu0 %v482
    %1013 = vmatprep.subr.bf16.mxu0 %v486
    %1014 = vmatpush1.bf16.msra.mxu0 %v485
    %1015 = vmatprep.subr.bf16.mxu0 %v489
    %1016 = vmatpush1.bf16.msra.mxu0 %v488
    %1017 = vmatprep.subr.bf16.mxu0 %v492
    %1018 = vmatpush1.bf16.msra.mxu0 %v491
    %1019 = vmatprep.subr.bf16.mxu0 0
    %1020 = vmatpush1.bf16.msra.mxu0 0
    %1021 = vmatprep.subr.bf16.mxu0 0
    %1022 = vmatpush1.bf16.msra.mxu0 0
    %1023 = vmatprep.subr.bf16.mxu0 0
    %1024 = vmatpush1.bf16.msra.mxu0 0
    %1025 = vmatprep.subr.bf16.mxu0 0
    %1026 = vmatpush1.bf16.msra.mxu0 0
    %1027 = vmatprep.subr.bf16.mxu0 0
    %1028 = vmatpush1.bf16.msra.mxu0 0
    %1029 = vmatprep.subr.bf16.mxu0 0
    %1030 = vmatpush1.bf16.msra.mxu0 0
    %1031 = vmatprep.subr.bf16.mxu0 0
    %1032 = vmatpush1.bf16.msra.mxu0 0
    %1033 = vmatprep.subr.bf16.mxu0 0
    %1034 = vmatpush1.bf16.msra.mxu0 0
    %1035 = vmatprep.mubr.bf16.mxu0 0
    %1036 = vmatmul.mubr.bf16.gmra.mrb[0].mxu0 %v1001
    %v1037 = vpop.f32.mrb[0].mxu0
    %v1038 = vadd.f32 %v522, %v1037
    %v1039 = vpop.f32.mrb[0].mxu0
    %v1040 = vadd.f32 %v526, %v1039
    %v1041 = vpop.f32.mrb[0].mxu0
    %v1042 = vpop.f32.mrb[0].mxu0
    %1043 = vdwg.mxu0
    %1044 = vmatprep.subr.bf16.mxu0 0
    %1045 = vmatpush1.bf16.msra.mxu0 %v472
    %1046 = vmatprep.subr.bf16.mxu0 0
    %1047 = vmatpush1.bf16.msra.mxu0 %v475
    %1048 = vmatprep.subr.bf16.mxu0 0
    %1049 = vmatpush1.bf16.msra.mxu0 %v478
    %1050 = vmatprep.subr.bf16.mxu0 0
    %1051 = vmatpush1.bf16.msra.mxu0 %v481
    %1052 = vmatprep.subr.bf16.mxu0 0
    %1053 = vmatpush1.bf16.msra.mxu0 %v484
    %1054 = vmatprep.subr.bf16.mxu0 0
    %1055 = vmatpush1.bf16.msra.mxu0 %v487
    %1056 = vmatprep.subr.bf16.mxu0 0
    %1057 = vmatpush1.bf16.msra.mxu0 %v490
    %1058 = vmatprep.subr.bf16.mxu0 0
    %1059 = vmatpush1.bf16.msra.mxu0 %v493
    %1060 = vmatprep.subr.bf16.mxu0 0
    %1061 = vmatpush1.bf16.msra.mxu0 0
    %1062 = vmatprep.subr.bf16.mxu0 0
    %1063 = vmatpush1.bf16.msra.mxu0 0
    %1064 = vmatprep.subr.bf16.mxu0 0
    %1065 = vmatpush1.bf16.msra.mxu0 0
    %1066 = vmatprep.subr.bf16.mxu0 0
    %1067 = vmatpush1.bf16.msra.mxu0 0
    %1068 = vmatprep.subr.bf16.mxu0 0
    %1069 = vmatpush1.bf16.msra.mxu0 0
    %1070 = vmatprep.subr.bf16.mxu0 0
    %1071 = vmatpush1.bf16.msra.mxu0 0
    %1072 = vmatprep.subr.bf16.mxu0 0
    %1073 = vmatpush1.bf16.msra.mxu0 0
    %1074 = vmatprep.subr.bf16.mxu0 0
    %1075 = vmatpush1.bf16.msra.mxu0 0
    %1076 = vmatprep.mubr.bf16.mxu0 0
    %1077 = vmatmul.mubr.bf16.gmra.mrb[0].mxu0 %v1001
    %v1078 = vpop.f32.mrb[0].mxu0
    %v1079 = vadd.f32 %v530, %v1078
    %v1080 = vpop.f32.mrb[0].mxu0
    %v1081 = vpop.f32.mrb[0].mxu0
    %v1082 = vpop.f32.mrb[0].mxu0
    %1083 = vdwg.mxu0
    %v1086 = vrot.slane %v1038, 4
    %v1087 = vrot.slane %v1040, 4
    %v1090 = vadd.f32 %v342, %v1086
    %v1091 = vadd.f32 %v344, %v1087
    %v1092 = vxor.u32 %v1090, 2147483648
    %v1093 = vxor.u32 %v1091, 2147483648
    %v1094 = vmul.f32 %v1092, 1.442695
    %v1095 = vpow.pop %v1094
    %v1096 = vmul.f32 %v1093, 1.442695
    %v1097 = vpow.pop %v1096
    %v1098 = vadd.f32 %v1095, 1.0
    %v1099 = vadd.f32 %v1097, 1.0
    %v1100 = vrcp.pop %v1098
    %v1101 = vmul.f32 1.0, %v1100
    %v1102 = vrcp.pop %v1099
    %v1103 = vmul.f32 1.0, %v1102
    %v1105 = vrot.slane %v1079, 4
    %v1107 = vmul.f32 %v1101, %v1105
    %v1108 = vadd.f32 %v383, %v1107
    %v1109 = vtanh.pop %v1108
    %v1111 = vrot.slane %v1109, 1
    %v1113 = vsub.f32 %v995, %v1111
    %v1115 = vrot.slane %v1113, 7
    %v1117 = vmul.f32 %v1103, %v1115
    %v1118 = vadd.f32 %v1109, %v1117
    %1119 = vst [vmem:[%s5] sm:$0x10] %v1118
    %v1120 = vpack.c.bf16 %v1118, %v1118
    %v1122 = vrot.slane %v1120, 2
    %1124 = vmatprep.subr.bf16.mxu0 %v471
    %1125 = vmatpush1.bf16.msra.mxu0 %v470
    %1126 = vmatprep.subr.bf16.mxu0 %v474
    %1127 = vmatpush1.bf16.msra.mxu0 %v473
    %1128 = vmatprep.subr.bf16.mxu0 %v477
    %1129 = vmatpush1.bf16.msra.mxu0 %v476
    %1130 = vmatprep.subr.bf16.mxu0 %v480
    %1131 = vmatpush1.bf16.msra.mxu0 %v479
    %1132 = vmatprep.subr.bf16.mxu0 %v483
    %1133 = vmatpush1.bf16.msra.mxu0 %v482
    %1134 = vmatprep.subr.bf16.mxu0 %v486
    %1135 = vmatpush1.bf16.msra.mxu0 %v485
    %1136 = vmatprep.subr.bf16.mxu0 %v489
    %1137 = vmatpush1.bf16.msra.mxu0 %v488
    %1138 = vmatprep.subr.bf16.mxu0 %v492
    %1139 = vmatpush1.bf16.msra.mxu0 %v491
    %1140 = vmatprep.subr.bf16.mxu0 0
    %1141 = vmatpush1.bf16.msra.mxu0 0
    %1142 = vmatprep.subr.bf16.mxu0 0
    %1143 = vmatpush1.bf16.msra.mxu0 0
    %1144 = vmatprep.subr.bf16.mxu0 0
    %1145 = vmatpush1.bf16.msra.mxu0 0
    %1146 = vmatprep.subr.bf16.mxu0 0
    %1147 = vmatpush1.bf16.msra.mxu0 0
    %1148 = vmatprep.subr.bf16.mxu0 0
    %1149 = vmatpush1.bf16.msra.mxu0 0
    %1150 = vmatprep.subr.bf16.mxu0 0
    %1151 = vmatpush1.bf16.msra.mxu0 0
    %1152 = vmatprep.subr.bf16.mxu0 0
    %1153 = vmatpush1.bf16.msra.mxu0 0
    %1154 = vmatprep.subr.bf16.mxu0 0
    %1155 = vmatpush1.bf16.msra.mxu0 0
    %1156 = vmatprep.mubr.bf16.mxu0 0
    %1157 = vmatmul.mubr.bf16.gmra.mrb[0].mxu0 %v1122
    %v1158 = vpop.f32.mrb[0].mxu0
    %v1159 = vadd.f32 %v522, %v1158
    %v1160 = vpop.f32.mrb[0].mxu0
    %v1161 = vadd.f32 %v526, %v1160
    %v1162 = vpop.f32.mrb[0].mxu0
    %v1163 = vpop.f32.mrb[0].mxu0
    %1164 = vdwg.mxu0
    %1165 = vmatprep.subr.bf16.mxu0 0
    %1166 = vmatpush1.bf16.msra.mxu0 %v472
    %1167 = vmatprep.subr.bf16.mxu0 0
    %1168 = vmatpush1.bf16.msra.mxu0 %v475
    %1169 = vmatprep.subr.bf16.mxu0 0
    %1170 = vmatpush1.bf16.msra.mxu0 %v478
    %1171 = vmatprep.subr.bf16.mxu0 0
    %1172 = vmatpush1.bf16.msra.mxu0 %v481
    %1173 = vmatprep.subr.bf16.mxu0 0
    %1174 = vmatpush1.bf16.msra.mxu0 %v484
    %1175 = vmatprep.subr.bf16.mxu0 0
    %1176 = vmatpush1.bf16.msra.mxu0 %v487
    %1177 = vmatprep.subr.bf16.mxu0 0
    %1178 = vmatpush1.bf16.msra.mxu0 %v490
    %1179 = vmatprep.subr.bf16.mxu0 0
    %1180 = vmatpush1.bf16.msra.mxu0 %v493
    %1181 = vmatprep.subr.bf16.mxu0 0
    %1182 = vmatpush1.bf16.msra.mxu0 0
    %1183 = vmatprep.subr.bf16.mxu0 0
    %1184 = vmatpush1.bf16.msra.mxu0 0
    %1185 = vmatprep.subr.bf16.mxu0 0
    %1186 = vmatpush1.bf16.msra.mxu0 0
    %1187 = vmatprep.subr.bf16.mxu0 0
    %1188 = vmatpush1.bf16.msra.mxu0 0
    %1189 = vmatprep.subr.bf16.mxu0 0
    %1190 = vmatpush1.bf16.msra.mxu0 0
    %1191 = vmatprep.subr.bf16.mxu0 0
    %1192 = vmatpush1.bf16.msra.mxu0 0
    %1193 = vmatprep.subr.bf16.mxu0 0
    %1194 = vmatpush1.bf16.msra.mxu0 0
    %1195 = vmatprep.subr.bf16.mxu0 0
    %1196 = vmatpush1.bf16.msra.mxu0 0
    %1197 = vmatprep.mubr.bf16.mxu0 0
    %1198 = vmatmul.mubr.bf16.gmra.mrb[0].mxu0 %v1122
    %v1199 = vpop.f32.mrb[0].mxu0
    %v1200 = vadd.f32 %v530, %v1199
    %v1201 = vpop.f32.mrb[0].mxu0
    %v1202 = vpop.f32.mrb[0].mxu0
    %v1203 = vpop.f32.mrb[0].mxu0
    %1204 = vdwg.mxu0
    %v1207 = vrot.slane %v1159, 3
    %v1208 = vrot.slane %v1161, 3
    %v1211 = vadd.f32 %v342, %v1207
    %v1212 = vadd.f32 %v344, %v1208
    %v1213 = vxor.u32 %v1211, 2147483648
    %v1214 = vxor.u32 %v1212, 2147483648
    %v1215 = vmul.f32 %v1213, 1.442695
    %v1216 = vpow.pop %v1215
    %v1217 = vmul.f32 %v1214, 1.442695
    %v1218 = vpow.pop %v1217
    %v1219 = vadd.f32 %v1216, 1.0
    %v1220 = vadd.f32 %v1218, 1.0
    %v1221 = vrcp.pop %v1219
    %v1222 = vmul.f32 1.0, %v1221
    %v1223 = vrcp.pop %v1220
    %v1224 = vmul.f32 1.0, %v1223
    %v1226 = vrot.slane %v1200, 3
    %v1228 = vmul.f32 %v1222, %v1226
    %v1229 = vadd.f32 %v383, %v1228
    %v1230 = vtanh.pop %v1229
    %v1232 = vrot.slane %v1230, 1
    %v1234 = vsub.f32 %v1118, %v1232
    %v1236 = vrot.slane %v1234, 7
    %v1238 = vmul.f32 %v1224, %v1236
    %v1239 = vadd.f32 %v1230, %v1238
    %1240 = vst [vmem:[%s5] sm:$0x20] %v1239
    %v1241 = vpack.c.bf16 %v1239, %v1239
    %v1243 = vshrl.u32 %v1241, 16
    %v1245 = vrot.slane %v1243, 2
    %1247 = vmatprep.subr.bf16.mxu0 %v471
    %1248 = vmatpush1.bf16.msra.mxu0 %v470
    %1249 = vmatprep.subr.bf16.mxu0 %v474
    %1250 = vmatpush1.bf16.msra.mxu0 %v473
    %1251 = vmatprep.subr.bf16.mxu0 %v477
    %1252 = vmatpush1.bf16.msra.mxu0 %v476
    %1253 = vmatprep.subr.bf16.mxu0 %v480
    %1254 = vmatpush1.bf16.msra.mxu0 %v479
    %1255 = vmatprep.subr.bf16.mxu0 %v483
    %1256 = vmatpush1.bf16.msra.mxu0 %v482
    %1257 = vmatprep.subr.bf16.mxu0 %v486
    %1258 = vmatpush1.bf16.msra.mxu0 %v485
    %1259 = vmatprep.subr.bf16.mxu0 %v489
    %1260 = vmatpush1.bf16.msra.mxu0 %v488
    %1261 = vmatprep.subr.bf16.mxu0 %v492
    %1262 = vmatpush1.bf16.msra.mxu0 %v491
    %1263 = vmatprep.subr.bf16.mxu0 0
    %1264 = vmatpush1.bf16.msra.mxu0 0
    %1265 = vmatprep.subr.bf16.mxu0 0
    %1266 = vmatpush1.bf16.msra.mxu0 0
    %1267 = vmatprep.subr.bf16.mxu0 0
    %1268 = vmatpush1.bf16.msra.mxu0 0
    %1269 = vmatprep.subr.bf16.mxu0 0
    %1270 = vmatpush1.bf16.msra.mxu0 0
    %1271 = vmatprep.subr.bf16.mxu0 0
    %1272 = vmatpush1.bf16.msra.mxu0 0
    %1273 = vmatprep.subr.bf16.mxu0 0
    %1274 = vmatpush1.bf16.msra.mxu0 0
    %1275 = vmatprep.subr.bf16.mxu0 0
    %1276 = vmatpush1.bf16.msra.mxu0 0
    %1277 = vmatprep.subr.bf16.mxu0 0
    %1278 = vmatpush1.bf16.msra.mxu0 0
    %1279 = vmatprep.mubr.bf16.mxu0 0
    %1280 = vmatmul.mubr.bf16.gmra.mrb[0].mxu0 %v1245
    %v1281 = vpop.f32.mrb[0].mxu0
    %v1282 = vadd.f32 %v522, %v1281
    %v1283 = vpop.f32.mrb[0].mxu0
    %v1284 = vadd.f32 %v526, %v1283
    %v1285 = vpop.f32.mrb[0].mxu0
    %v1286 = vpop.f32.mrb[0].mxu0
    %1287 = vdwg.mxu0
    %1288 = vmatprep.subr.bf16.mxu0 0
    %1289 = vmatpush1.bf16.msra.mxu0 %v472
    %1290 = vmatprep.subr.bf16.mxu0 0
    %1291 = vmatpush1.bf16.msra.mxu0 %v475
    %1292 = vmatprep.subr.bf16.mxu0 0
    %1293 = vmatpush1.bf16.msra.mxu0 %v478
    %1294 = vmatprep.subr.bf16.mxu0 0
    %1295 = vmatpush1.bf16.msra.mxu0 %v481
    %1296 = vmatprep.subr.bf16.mxu0 0
    %1297 = vmatpush1.bf16.msra.mxu0 %v484
    %1298 = vmatprep.subr.bf16.mxu0 0
    %1299 = vmatpush1.bf16.msra.mxu0 %v487
    %1300 = vmatprep.subr.bf16.mxu0 0
    %1301 = vmatpush1.bf16.msra.mxu0 %v490
    %1302 = vmatprep.subr.bf16.mxu0 0
    %1303 = vmatpush1.bf16.msra.mxu0 %v493
    %1304 = vmatprep.subr.bf16.mxu0 0
    %1305 = vmatpush1.bf16.msra.mxu0 0
    %1306 = vmatprep.subr.bf16.mxu0 0
    %1307 = vmatpush1.bf16.msra.mxu0 0
    %1308 = vmatprep.subr.bf16.mxu0 0
    %1309 = vmatpush1.bf16.msra.mxu0 0
    %1310 = vmatprep.subr.bf16.mxu0 0
    %1311 = vmatpush1.bf16.msra.mxu0 0
    %1312 = vmatprep.subr.bf16.mxu0 0
    %1313 = vmatpush1.bf16.msra.mxu0 0
    %1314 = vmatprep.subr.bf16.mxu0 0
    %1315 = vmatpush1.bf16.msra.mxu0 0
    %1316 = vmatprep.subr.bf16.mxu0 0
    %1317 = vmatpush1.bf16.msra.mxu0 0
    %1318 = vmatprep.subr.bf16.mxu0 0
    %1319 = vmatpush1.bf16.msra.mxu0 0
    %1320 = vmatprep.mubr.bf16.mxu0 0
    %1321 = vmatmul.mubr.bf16.gmra.mrb[0].mxu0 %v1245
    %v1322 = vpop.f32.mrb[0].mxu0
    %v1323 = vadd.f32 %v530, %v1322
    %v1324 = vpop.f32.mrb[0].mxu0
    %v1325 = vpop.f32.mrb[0].mxu0
    %v1326 = vpop.f32.mrb[0].mxu0
    %1327 = vdwg.mxu0
    %v1330 = vrot.slane %v1282, 2
    %v1331 = vrot.slane %v1284, 2
    %v1334 = vadd.f32 %v342, %v1330
    %v1335 = vadd.f32 %v344, %v1331
    %v1336 = vxor.u32 %v1334, 2147483648
    %v1337 = vxor.u32 %v1335, 2147483648
    %v1338 = vmul.f32 %v1336, 1.442695
    %v1339 = vpow.pop %v1338
    %v1340 = vmul.f32 %v1337, 1.442695
    %v1341 = vpow.pop %v1340
    %v1342 = vadd.f32 %v1339, 1.0
    %v1343 = vadd.f32 %v1341, 1.0
    %v1344 = vrcp.pop %v1342
    %v1345 = vmul.f32 1.0, %v1344
    %v1346 = vrcp.pop %v1343
    %v1347 = vmul.f32 1.0, %v1346
    %v1349 = vrot.slane %v1323, 2
    %v1351 = vmul.f32 %v1345, %v1349
    %v1352 = vadd.f32 %v383, %v1351
    %v1353 = vtanh.pop %v1352
    %v1355 = vrot.slane %v1353, 1
    %v1357 = vsub.f32 %v1239, %v1355
    %v1359 = vrot.slane %v1357, 7
    %v1361 = vmul.f32 %v1347, %v1359
    %v1362 = vadd.f32 %v1353, %v1361
    %1363 = vst [vmem:[%s5] sm:$0x40] %v1362
    %v1364 = vpack.c.bf16 %v1362, %v1362
    %v1366 = vrot.slane %v1364, 3
    %1368 = vmatprep.subr.bf16.mxu0 %v471
    %1369 = vmatpush1.bf16.msra.mxu0 %v470
    %1370 = vmatprep.subr.bf16.mxu0 %v474
    %1371 = vmatpush1.bf16.msra.mxu0 %v473
    %1372 = vmatprep.subr.bf16.mxu0 %v477
    %1373 = vmatpush1.bf16.msra.mxu0 %v476
    %1374 = vmatprep.subr.bf16.mxu0 %v480
    %1375 = vmatpush1.bf16.msra.mxu0 %v479
    %1376 = vmatprep.subr.bf16.mxu0 %v483
    %1377 = vmatpush1.bf16.msra.mxu0 %v482
    %1378 = vmatprep.subr.bf16.mxu0 %v486
    %1379 = vmatpush1.bf16.msra.mxu0 %v485
    %1380 = vmatprep.subr.bf16.mxu0 %v489
    %1381 = vmatpush1.bf16.msra.mxu0 %v488
    %1382 = vmatprep.subr.bf16.mxu0 %v492
    %1383 = vmatpush1.bf16.msra.mxu0 %v491
    %1384 = vmatprep.subr.bf16.mxu0 0
    %1385 = vmatpush1.bf16.msra.mxu0 0
    %1386 = vmatprep.subr.bf16.mxu0 0
    %1387 = vmatpush1.bf16.msra.mxu0 0
    %1388 = vmatprep.subr.bf16.mxu0 0
    %1389 = vmatpush1.bf16.msra.mxu0 0
    %1390 = vmatprep.subr.bf16.mxu0 0
    %1391 = vmatpush1.bf16.msra.mxu0 0
    %1392 = vmatprep.subr.bf16.mxu0 0
    %1393 = vmatpush1.bf16.msra.mxu0 0
    %1394 = vmatprep.subr.bf16.mxu0 0
    %1395 = vmatpush1.bf16.msra.mxu0 0
    %1396 = vmatprep.subr.bf16.mxu0 0
    %1397 = vmatpush1.bf16.msra.mxu0 0
    %1398 = vmatprep.subr.bf16.mxu0 0
    %1399 = vmatpush1.bf16.msra.mxu0 0
    %1400 = vmatprep.mubr.bf16.mxu0 0
    %1401 = vmatmul.mubr.bf16.gmra.mrb[0].mxu0 %v1366
    %v1402 = vpop.f32.mrb[0].mxu0
    %v1403 = vadd.f32 %v522, %v1402
    %v1404 = vpop.f32.mrb[0].mxu0
    %v1405 = vadd.f32 %v526, %v1404
    %v1406 = vpop.f32.mrb[0].mxu0
    %v1407 = vpop.f32.mrb[0].mxu0
    %1408 = vdwg.mxu0
    %1409 = vmatprep.subr.bf16.mxu0 0
    %1410 = vmatpush1.bf16.msra.mxu0 %v472
    %1411 = vmatprep.subr.bf16.mxu0 0
    %1412 = vmatpush1.bf16.msra.mxu0 %v475
    %1413 = vmatprep.subr.bf16.mxu0 0
    %1414 = vmatpush1.bf16.msra.mxu0 %v478
    %1415 = vmatprep.subr.bf16.mxu0 0
    %1416 = vmatpush1.bf16.msra.mxu0 %v481
    %1417 = vmatprep.subr.bf16.mxu0 0
    %1418 = vmatpush1.bf16.msra.mxu0 %v484
    %1419 = vmatprep.subr.bf16.mxu0 0
    %1420 = vmatpush1.bf16.msra.mxu0 %v487
    %1421 = vmatprep.subr.bf16.mxu0 0
    %1422 = vmatpush1.bf16.msra.mxu0 %v490
    %1423 = vmatprep.subr.bf16.mxu0 0
    %1424 = vmatpush1.bf16.msra.mxu0 %v493
    %1425 = vmatprep.subr.bf16.mxu0 0
    %1426 = vmatpush1.bf16.msra.mxu0 0
    %1427 = vmatprep.subr.bf16.mxu0 0
    %1428 = vmatpush1.bf16.msra.mxu0 0
    %1429 = vmatprep.subr.bf16.mxu0 0
    %1430 = vmatpush1.bf16.msra.mxu0 0
    %1431 = vmatprep.subr.bf16.mxu0 0
    %1432 = vmatpush1.bf16.msra.mxu0 0
    %1433 = vmatprep.subr.bf16.mxu0 0
    %1434 = vmatpush1.bf16.msra.mxu0 0
    %1435 = vmatprep.subr.bf16.mxu0 0
    %1436 = vmatpush1.bf16.msra.mxu0 0
    %1437 = vmatprep.subr.bf16.mxu0 0
    %1438 = vmatpush1.bf16.msra.mxu0 0
    %1439 = vmatprep.subr.bf16.mxu0 0
    %1440 = vmatpush1.bf16.msra.mxu0 0
    %1441 = vmatprep.mubr.bf16.mxu0 0
    %1442 = vmatmul.mubr.bf16.gmra.mrb[0].mxu0 %v1366
    %v1443 = vpop.f32.mrb[0].mxu0
    %v1444 = vadd.f32 %v530, %v1443
    %v1445 = vpop.f32.mrb[0].mxu0
    %v1446 = vpop.f32.mrb[0].mxu0
    %v1447 = vpop.f32.mrb[0].mxu0
    %1448 = vdwg.mxu0
    %v1451 = vrot.slane %v1403, 1
    %v1452 = vrot.slane %v1405, 1
    %v1455 = vadd.f32 %v342, %v1451
    %v1456 = vadd.f32 %v344, %v1452
    %v1457 = vxor.u32 %v1455, 2147483648
    %v1458 = vxor.u32 %v1456, 2147483648
    %v1459 = vmul.f32 %v1457, 1.442695
    %v1460 = vpow.pop %v1459
    %v1461 = vmul.f32 %v1458, 1.442695
    %v1462 = vpow.pop %v1461
    %v1463 = vadd.f32 %v1460, 1.0
    %v1464 = vadd.f32 %v1462, 1.0
    %v1465 = vrcp.pop %v1463
    %v1466 = vmul.f32 1.0, %v1465
    %v1467 = vrcp.pop %v1464
    %v1468 = vmul.f32 1.0, %v1467
    %v1470 = vrot.slane %v1444, 1
    %v1472 = vmul.f32 %v1466, %v1470
    %v1473 = vadd.f32 %v383, %v1472
    %v1474 = vtanh.pop %v1473
    %v1476 = vrot.slane %v1474, 1
    %v1478 = vsub.f32 %v1362, %v1476
    %v1480 = vrot.slane %v1478, 7
    %v1482 = vmul.f32 %v1468, %v1480
    %v1483 = vadd.f32 %v1474, %v1482
    %1484 = vst [vmem:[%s5] sm:$0x80] %v1483
    // Predicated region
    $region34: #{encoder_rnn_forward.1} parent=1 // pred_check
      _
    $region35: #{encoder_rnn_forward.1} parent=1 // pred_check_branch
      %1486 = sbr.rel (0) target = $region37
    $region36: #{encoder_rnn_forward.1} parent=1 // pred_region
      _
    $region37: #{encoder_rnn_forward.1} parent=1 // pred_fallthru
      _
    // Predicated region
    $region38: #{encoder_rnn_forward.1} parent=1 // pred_check
      _
    $region39: #{encoder_rnn_forward.1} parent=1 // pred_check_branch
      %1488 = sbr.rel (0) target = $region41
    $region40: #{encoder_rnn_forward.1} parent=1 // pred_region
      _
    $region41: #{encoder_rnn_forward.1} parent=1 // pred_fallthru
      _
    %1489 = vsyncpa [#allocation4], 1
    %1490 = vsyncpa [#allocation8], 1
    %1491 = vsyncpa [#allocation5], 1

</llo_original>
